<compile_context>
chip_gen: v7x
topology: tpu7x:2x2x1
jax: 0.10.0
libtpu: 0.0.40
codegen_flags: <defaults>
</compile_context>

<pallas_src>
import functools

import jax
import jax.numpy as jnp
from jax.experimental import pallas as pl
from jax.experimental.pallas import tpu as pltpu


# ---------------------------------------------------------------------------
# Helpers: tile picking and VMEM budgeting.
# ---------------------------------------------------------------------------
def _vmem_limit(est_bytes):
    """Scoped-VMEM limit: generous vs the estimate, capped for v7x headroom."""
    return int(min(max(2 * est_bytes, 32 * 1024 * 1024), 48 * 1024 * 1024))


def _pick_row_tile(H, W, max_flat):
    """Largest divisor th of H with th*W <= max_flat; prefer sublane-aligned
    tiles (th % 8 == 0 or th == H) and MXU-friendly th*W % 256 == 0."""
    divs = [d for d in range(1, H + 1) if H % d == 0]
    aligned = [d for d in divs if d % 8 == 0 or d == H]
    for pool in (aligned, divs):
        fits = [d for d in pool if d * W <= max_flat]
        if fits:
            best = max(fits)
            pref = [d for d in fits if (d * W) % 256 == 0 and 2 * d >= best]
            return max(pref) if pref else best
    return min(aligned) if aligned else 1


# ---------------------------------------------------------------------------
# Kernel 1: pointwise (1x1) conv1 as matmul, fused (folded-BN) bias + ReLU.
# ---------------------------------------------------------------------------
def _pw_conv_bias_relu_kernel(x_ref, w_ref, b_ref, o_ref):
    # x_ref: (tm, Cin) bf16   w_ref: (Cin, Cout) bf16   b_ref: (1, Cout) f32
    y = jnp.dot(x_ref[...], w_ref[...], preferred_element_type=jnp.float32)
    o_ref[...] = jnp.maximum(y + b_ref[...], 0.0).astype(o_ref.dtype)


def pointwise_conv_bias_relu(x2d, w, bias, *, tm=1024):
    # HBM-bound: large row tiles amortize per-step pipeline overhead; cdiv grid
    # so tail rows are handled by Pallas output masking (never fed to SE sums).
    M, Cin = x2d.shape
    Cout = w.shape[1]
    tm = min(tm, M)
    if tm < M and tm % 8:
        tm = max(8, (tm // 8) * 8)          # sublane-aligned row tiles

    def est(t):  # double-buffered bf16 in/out blocks + weight + f32 temp
        return 2 * (t * (Cin + Cout) + Cin * Cout) * 2 + t * Cout * 4 + Cout * 4

    while tm > 8 and est(tm) > 40 * 1024 * 1024:
        tm = max(8, tm // 2)

    return pl.pallas_call(
        _pw_conv_bias_relu_kernel,
        out_shape=jax.ShapeDtypeStruct((M, Cout), x2d.dtype),
        grid=(pl.cdiv(M, tm),),
        in_specs=[
            pl.BlockSpec((tm, Cin), lambda i: (i, 0)),
            pl.BlockSpec((Cin, Cout), lambda i: (0, 0)),
            pl.BlockSpec((1, Cout), lambda i: (0, 0)),
        ],
        out_specs=pl.BlockSpec((tm, Cout), lambda i: (i, 0)),
        compiler_params=pltpu.CompilerParams(
            dimension_semantics=("parallel",),
            vmem_limit_bytes=_vmem_limit(est(tm))),
    )(x2d, w, bias.reshape(1, Cout).astype(jnp.float32))


# ---------------------------------------------------------------------------
# Kernel 2: grouped 3x3 conv (block-diag dense weight) via a single im2col
#           matmul (K = 9*C2) + bn2 + ReLU, with conv3 + bn3 fused into the
#           epilogue, plus per-(batch, row-tile) SE pool partial sums.
# ---------------------------------------------------------------------------
def _gconv3x3_conv3_kernel(xp_ref, w2_ref, b2_ref, w3_ref, b3_ref,
                           o_ref, psum_ref, patch_ref, *, th, W):
    # xp_ref : (1, H+2, W, C2) bf16  -- H-halo padded, whole image per batch
    # w2_ref : (9*C2, C2) bf16       -- block-diag grouped 3x3 weight (im2col K)
    # b2_ref : (1, C2) f32   w3_ref : (C2, C4) bf16   b3_ref : (1, C4) f32
    # o_ref  : (1, th, W, C4) bf16   psum_ref: (1, 1, 1, C4) f32
    # patch_ref: (th, W, 9*C2) bf16 VMEM scratch (im2col patch)
    i = pl.program_id(1)
    row0 = pl.multiple_of(i * th, th)
    C2 = w3_ref.shape[0]
    C4 = w3_ref.shape[1]

    # Column masks: the width halo is folded into the kernel -- taps reaching
    # outside [0, W) are zeroed instead of reading wrapper-padded columns.
    col = jax.lax.broadcasted_iota(jnp.int32, (th, W, C2), 1)
    keep = (col >= 1, None, col <= W - 2)          # kw = 0, 1, 2

    # Build the full im2col patch once.  H slices are tile-aligned; the +/-1
    # width shift is a 32-bit sublane roll (XLU) + mask, never an unaligned
    # W-offset slice.  Then conv2 is ONE matmul (no chained MXU pops / adds).
    for kh in range(3):
        slab = xp_ref[:, pl.ds(row0 + kh, th), :, :].reshape(th, W, C2)
        slab32 = slab.astype(jnp.float32)          # canonical 32-bit roll path
        for kw in range(3):
            tap = kh * 3 + kw
            if kw == 1:
                t = slab
            else:
                shifted = pltpu.roll(slab32, shift=(1 - kw) % W, axis=1)
                t = jnp.where(keep[kw], shifted, 0.0).astype(jnp.bfloat16)
            patch_ref[:, :, tap * C2:(tap + 1) * C2] = t

    patch = patch_ref[...].reshape(th * W, 9 * C2)

    # conv2 (+ folded bn2 bias) + ReLU, accumulate in f32.
    h = jnp.dot(patch, w2_ref[...], preferred_element_type=jnp.float32)
    h = jnp.maximum(h + b2_ref[...], 0.0)

    # Fused conv3 (+ folded bn3 bias).
    y = jnp.dot(h.astype(w3_ref.dtype), w3_ref[...],
                preferred_element_type=jnp.float32) + b3_ref[...]

    o_ref[...] = y.reshape(1, th, W, C4).astype(o_ref.dtype)
    # Per-tile SE global-average-pool partial sum; reduced in plain JAX so both
    # grid axes stay "parallel" (2-TC megacore sharding on v7x).
    psum_ref[...] = jnp.sum(y, axis=0).reshape(1, 1, 1, C4)


def grouped_conv3x3_conv3_fused(x_nhwc, w2_flat, b2, w3, b3):
    N, H, W, C2 = x_nhwc.shape
    C4 = w3.shape[1]

    per_flat = (9 * C2 * 2          # im2col patch scratch (bf16)
                + C2 * 4 + C4 * 4   # f32 conv2 / conv3 results
                + 2 * C4 * 2)       # double-buffered bf16 output tile
    th = _pick_row_tile(H, W, max(256, (12 * 1024 * 1024) // per_flat))
    n_tiles = H // th

    # TODO(synk): fold this remaining H-halo pad into kernel 1's output write.
    xp = jnp.pad(x_nhwc, ((0, 0), (1, 1), (0, 0), (0, 0)))

    est = (2 * (H + 2) * W * C2 * 2                 # resident padded image (x2 buf)
           + 2 * (9 * C2 * C2 + C2 * C4) * 2        # conv weights (x2 buf)
           + 2 * th * W * C4 * 2                    # output tile (x2 buf)
           + th * W * 9 * C2 * 2                    # im2col scratch
           + th * W * (C2 + C4) * 4                 # f32 matmul results
           + th * W * C2 * 4)                       # masks / temporaries

    kernel = functools.partial(_gconv3x3_conv3_kernel, th=th, W=W)
    y, psums = pl.pallas_call(
        kernel,
        out_shape=(jax.ShapeDtypeStruct((N, H, W, C4), x_nhwc.dtype),
                   jax.ShapeDtypeStruct((N, n_tiles, 1, C4), jnp.float32)),
        grid=(N, n_tiles),
        in_specs=[
            pl.BlockSpec((1, H + 2, W, C2), lambda n, i: (n, 0, 0, 0)),
            pl.BlockSpec((9 * C2, C2), lambda n, i: (0, 0)),
            pl.BlockSpec((1, C2), lambda n, i: (0, 0)),
            pl.BlockSpec((C2, C4), lambda n, i: (0, 0)),
            pl.BlockSpec((1, C4), lambda n, i: (0, 0)),
        ],
        out_specs=(
            pl.BlockSpec((1, th, W, C4), lambda n, i: (n, i, 0, 0)),
            pl.BlockSpec((1, 1, 1, C4), lambda n, i: (n, i, 0, 0)),
        ),
        scratch_shapes=[pltpu.VMEM((th, W, 9 * C2), x_nhwc.dtype)],
        compiler_params=pltpu.CompilerParams(
            dimension_semantics=("parallel", "parallel"),
            vmem_limit_bytes=_vmem_limit(est)),
    )(xp, w2_flat, b2.reshape(1, C2).astype(jnp.float32),
      w3, b3.reshape(1, C4).astype(jnp.float32))
    return y, psums


# ---------------------------------------------------------------------------
# Kernel 3: SE channel scale + residual add + final ReLU (tiled elementwise,
#           bf16 output to halve HBM write traffic).
# ---------------------------------------------------------------------------
def _se_scale_residual_relu_kernel(y_ref, s_ref, r_ref, o_ref):
    # y_ref: (1, th, W, C4) bf16  s_ref: (1, 1, C4) f32  r_ref: (1, th, W, C4) bf16
    y = y_ref[...].astype(jnp.float32)
    s = s_ref[...].reshape(1, 1, 1, s_ref.shape[-1])
    out = y * s + r_ref[...].astype(jnp.float32)
    o_ref[...] = jnp.maximum(out, 0.0).astype(o_ref.dtype)


def se_scale_residual_relu(y_nhwc, s_nc, residual_nhwc):
    N, H, W, C4 = y_nhwc.shape
    per_flat = 2 * 3 * C4 * 2 + 2 * C4 * 4     # x2-buffered bf16 blocks + f32 temps
    th = _pick_row_tile(H, W, max(256, (16 * 1024 * 1024) // per_flat))
    n_tiles = H // th
    est = per_flat * th * W + 2 * C4 * 4
    return pl.pallas_call(
        _se_scale_residual_relu_kernel,
        out_shape=jax.ShapeDtypeStruct((N, H, W, C4), jnp.bfloat16),
        grid=(N, n_tiles),
        in_specs=[
            pl.BlockSpec((1, th, W, C4), lambda n, i: (n, i, 0, 0)),
            pl.BlockSpec((1, 1, C4), lambda n, i: (n, 0, 0)),
            pl.BlockSpec((1, th, W, C4), lambda n, i: (n, i, 0, 0)),
        ],
        out_specs=pl.BlockSpec((1, th, W, C4), lambda n, i: (n, i, 0, 0)),
        compiler_params=pltpu.CompilerParams(
            dimension_semantics=("parallel", "parallel"),
            vmem_limit_bytes=_vmem_limit(est)),
    )(y_nhwc, s_nc.reshape(N, 1, C4).astype(jnp.float32), residual_nhwc)


# ---------------------------------------------------------------------------
# Parameter construction (BN folded into weights, conv weights cast to bf16).
# ---------------------------------------------------------------------------
def init_params(key, inplanes, planes, cardinality, reduction=16):
    c2, c4 = planes * 2, planes * 4
    cr = max(1, c4 // reduction)
    cg = c2 // cardinality
    ks = jax.random.split(key, 12)

    def bn_fold(kg, kb, c, eps=1e-5):
        gamma = 1.0 + 0.1 * jax.random.normal(kg, (c,), jnp.float32)
        beta = 0.1 * jax.random.normal(kb, (c,), jnp.float32)
        mean = jnp.zeros((c,), jnp.float32)
        var = jnp.ones((c,), jnp.float32)
        scale = gamma * jax.lax.rsqrt(var + eps)
        bias = beta - mean * scale
        return scale, bias

    # conv1: 1x1 (inplanes -> c2), stored as (Cin, Cout) for matmul.
    w1 = 0.1 * jax.random.normal(ks[0], (inplanes, c2), jnp.float32)
    s1, b1 = bn_fold(ks[1], ks[2], c2)

    # conv2: 3x3 grouped -> block-diagonal dense (3,3,C2,C2) weight
    # (mathematically identical to the grouped conv).
    # TODO(synk): for C2 > ~256 replace with a group-batched matmul formulation.
    wg = 0.1 * jax.random.normal(ks[3], (cardinality, 3, 3, cg, cg), jnp.float32)
    w2 = jnp.zeros((3, 3, c2, c2), jnp.float32)
    for g in range(cardinality):
        w2 = w2.at[:, :, g * cg:(g + 1) * cg, g * cg:(g + 1) * cg].set(wg[g])
    s2, b2 = bn_fold(ks[4], ks[5], c2)

    # conv3: 1x1 (c2 -> c4).
    w3 = 0.1 * jax.random.normal(ks[6], (c2, c4), jnp.float32)
    s3, b3 = bn_fold(ks[7], ks[8], c4)

    # SE layer fully-connected weights (nn.Linear with bias).
    fc1_w = 0.1 * jax.random.normal(ks[9], (c4, cr), jnp.float32)
    fc1_b = 0.1 * jax.random.normal(ks[10], (cr,), jnp.float32)
    kf = jax.random.split(ks[11], 2)
    fc2_w = 0.1 * jax.random.normal(kf[0], (cr, c4), jnp.float32)
    fc2_b = 0.1 * jax.random.normal(kf[1], (c4,), jnp.float32)

    # Fold BN scale into conv output channels (one-time, host side); carry conv
    # weights in bf16, biases / FC params in f32.  w2 is flattened to the
    # im2col K layout (tap-major, then input channel): (9*C2, C2).
    return dict(
        w1=(w1 * s1[None, :]).astype(jnp.bfloat16), b1=b1,
        w2=(w2 * s2[None, None, None, :]).reshape(9 * c2, c2).astype(jnp.bfloat16),
        b2=b2,
        w3=(w3 * s3[None, :]).astype(jnp.bfloat16), b3=b3,
        fc1_w=fc1_w, fc1_b=fc1_b, fc2_w=fc2_w, fc2_b=fc2_b)


# ---------------------------------------------------------------------------
# Full forward (glue in plain JAX).
# ---------------------------------------------------------------------------
@jax.jit
def bottleneckx_forward(x_nchw, params):
    # bf16 BEFORE the layout transpose (halves the transpose pass's HBM bytes).
    xb = jnp.transpose(x_nchw.astype(jnp.bfloat16), (0, 2, 3, 1))   # NHWC bf16
    N, H, W, Cin = xb.shape
    c2 = params["w1"].shape[1]
    c4 = params["w3"].shape[1]

    # conv1 + bn1 + relu
    y = pointwise_conv_bias_relu(xb.reshape(N * H * W, Cin),
                                 params["w1"], params["b1"])
    y = y.reshape(N, H, W, c2)

    # conv2 (grouped 3x3) + bn2 + relu, fused conv3 + bn3, + SE pool partials.
    y, psums = grouped_conv3x3_conv3_fused(y, params["w2"], params["b2"],
                                           params["w3"], params["b3"])

    # SE excitation on the tiny (N, C4) pooled tensor -> plain JAX.
    pooled = jnp.sum(psums, axis=(1, 2)) / jnp.float32(H * W)
    h = jnp.maximum(pooled @ params["fc1_w"] + params["fc1_b"], 0.0)
    s = jax.nn.sigmoid(h @ params["fc2_w"] + params["fc2_b"])        # (N, C4)

    # SE scale + residual add (downsample=None -> residual = x) + final relu.
    # TODO(synk): residual is the bf16 cast of x (tiny deviation vs f32 ref).
    out = se_scale_residual_relu(y, s, xb)                           # bf16

    # back to NCHW; cast to f32 after the transpose (reads bf16, writes f32).
    return jnp.transpose(out, (0, 3, 1, 2)).astype(jnp.float32)


if __name__ == "__main__":
    key = jax.random.PRNGKey(0)
    k_x, k_p = jax.random.split(key)

    planes = 8
    cardinality = 4
    inplanes = planes * 4          # = 32 so residual add is valid (downsample=None)
    N, H, W = 2, 8, 8

    x = jax.random.normal(k_x, (N, inplanes, H, W), jnp.float32)
    params = init_params(k_p, inplanes, planes, cardinality)

    out = bottleneckx_forward(x, params)
    out = jax.block_until_ready(out)
    assert out.shape == (N, planes * 4, H, W)
    assert bool(jnp.all(jnp.isfinite(out)))
    print("KERNEL_OK")
</pallas_src>

<mosaic_0001>
module attributes {stable_mosaic.version = 11 : i64} {
  func.func @_pw_conv_bias_relu_kernel(%arg0: i32, %arg1: memref<128x32xbf16, #tpu.memory_space<vmem>>, %arg2: memref<32x16xbf16, #tpu.memory_space<vmem>>, %arg3: memref<1x16xf32, #tpu.memory_space<vmem>>, %arg4: memref<128x16xbf16, #tpu.memory_space<vmem>>) attributes {dimension_semantics = [#tpu.dimension_semantics<parallel>], iteration_bounds = array<i64: 1>, scalar_prefetch = 0 : i64, scratch_operands = 0 : i64, tpu.core_type = #tpu.core_type<tc>, window_params = [{transform_indices = @transform_0, window_bounds = array<i64: 128, 32>}, {pipeline_mode = #tpu.pipeline_mode<synchronous>, transform_indices = @transform_1, window_bounds = array<i64: 32, 16>}, {pipeline_mode = #tpu.pipeline_mode<synchronous>, transform_indices = @transform_2, window_bounds = array<i64: 1, 16>}, {transform_indices = @transform_3, window_bounds = array<i64: 128, 16>}]} {
    %c0 = arith.constant 0 : index
    %c0_0 = arith.constant 0 : index
    %0 = vector.load %arg1[%c0, %c0_0] : memref<128x32xbf16, #tpu.memory_space<vmem>>, vector<128x32xbf16>
    %c0_1 = arith.constant 0 : index
    %c0_2 = arith.constant 0 : index
    %1 = vector.load %arg2[%c0_1, %c0_2] : memref<32x16xbf16, #tpu.memory_space<vmem>>, vector<32x16xbf16>
    %cst = arith.constant dense<0.000000e+00> : vector<128x16xf32>
    %2 = tpu.matmul %0, %1, %cst {dimension_numbers = #tpu.dot_dimension_numbers<[1], [0], [0], [1], [0, 0, 1, 1], [], []>} : vector<128x32xbf16>, vector<32x16xbf16>, vector<128x16xf32> -> vector<128x16xf32>
    %c0_3 = arith.constant 0 : index
    %c0_4 = arith.constant 0 : index
    %3 = vector.load %arg3[%c0_3, %c0_4] : memref<1x16xf32, #tpu.memory_space<vmem>>, vector<1x16xf32>
    %4 = vector.broadcast %3 : vector<1x16xf32> to vector<128x16xf32>
    %5 = arith.addf %2, %4 : vector<128x16xf32>
    %cst_5 = arith.constant 0.000000e+00 : f32
    %6 = vector.broadcast %cst_5 : f32 to vector<128x16xf32>
    %7 = arith.maximumf %5, %6 : vector<128x16xf32>
    %8 = arith.truncf %7 : vector<128x16xf32> to vector<128x16xbf16>
    %c0_6 = arith.constant 0 : index
    %c0_7 = arith.constant 0 : index
    %9 = vector.load %arg4[%c0_6, %c0_7] : memref<128x16xbf16, #tpu.memory_space<vmem>>, vector<128x16xbf16>
    tpu.vector_store %arg4[%c0_6, %c0_7], %8 {strides = array<i32>} : memref<128x16xbf16, #tpu.memory_space<vmem>>, vector<128x16xbf16>,
    return
  }
  func.func @transform_0(%arg0: i32) -> (i32, i32) {
    %c0_i32 = arith.constant 0 : i32
    %c0_i32_0 = arith.constant 0 : i32
    return %arg0, %c0_i32 : i32, i32
  }
  func.func @transform_1(%arg0: i32) -> (i32, i32) {
    %c0_i32 = arith.constant 0 : i32
    %c0_i32_0 = arith.constant 0 : i32
    %c0_i32_1 = arith.constant 0 : i32
    return %c0_i32, %c0_i32_0 : i32, i32
  }
  func.func @transform_2(%arg0: i32) -> (i32, i32) {
    %c0_i32 = arith.constant 0 : i32
    %c0_i32_0 = arith.constant 0 : i32
    %c0_i32_1 = arith.constant 0 : i32
    return %c0_i32, %c0_i32_0 : i32, i32
  }
  func.func @transform_3(%arg0: i32) -> (i32, i32) {
    %c0_i32 = arith.constant 0 : i32
    %c0_i32_0 = arith.constant 0 : i32
    return %arg0, %c0_i32 : i32, i32
  }
}

module attributes {stable_mosaic.version = 11 : i64} {
  func.func @_gconv3x3_conv3_kernel(%arg0: i32, %arg1: i32, %arg2: memref<1x10x8x16xbf16, #tpu.memory_space<vmem>>, %arg3: memref<144x16xbf16, #tpu.memory_space<vmem>>, %arg4: memref<1x16xf32, #tpu.memory_space<vmem>>, %arg5: memref<16x32xbf16, #tpu.memory_space<vmem>>, %arg6: memref<1x32xf32, #tpu.memory_space<vmem>>, %arg7: memref<1x8x8x32xbf16, #tpu.memory_space<vmem>>, %arg8: memref<1x1x1x32xf32, #tpu.memory_space<vmem>>, %arg9: memref<8x8x144xbf16, #tpu.memory_space<vmem>>) attributes {dimension_semantics = [#tpu.dimension_semantics<parallel>, #tpu.dimension_semantics<parallel>], iteration_bounds = array<i64: 2, 1>, scalar_prefetch = 0 : i64, scratch_operands = 1 : i64, tpu.core_type = #tpu.core_type<tc>, window_params = [{transform_indices = @transform_0, window_bounds = array<i64: 1, 10, 8, 16>}, {pipeline_mode = #tpu.pipeline_mode<synchronous>, transform_indices = @transform_1, window_bounds = array<i64: 144, 16>}, {pipeline_mode = #tpu.pipeline_mode<synchronous>, transform_indices = @transform_2, window_bounds = array<i64: 1, 16>}, {pipeline_mode = #tpu.pipeline_mode<synchronous>, transform_indices = @transform_3, window_bounds = array<i64: 16, 32>}, {pipeline_mode = #tpu.pipeline_mode<synchronous>, transform_indices = @transform_4, window_bounds = array<i64: 1, 32>}, {transform_indices = @transform_5, window_bounds = array<i64: 1, 8, 8, 32>}, {transform_indices = @transform_6, window_bounds = array<i64: 1, 1, 1, 32>}]} {
    %c8_i32 = arith.constant 8 : i32
    %0 = arith.muli %arg1, %c8_i32 : i32
    %1 = tpu.assume_multiple %0, 8 : i32
    %2 = tpu.iota {dimensions = array<i32: 1>} : vector<8x8x16xi32>
    %c1_i32 = arith.constant 1 : i32
    %3 = vector.broadcast %c1_i32 : i32 to vector<8x8x16xi32>
    %4 = arith.cmpi sge, %2, %3 : vector<8x8x16xi32>
    %c6_i32 = arith.constant 6 : i32
    %5 = vector.broadcast %c6_i32 : i32 to vector<8x8x16xi32>
    %6 = arith.cmpi sle, %2, %5 : vector<8x8x16xi32>
    %c0_i32 = arith.constant 0 : i32
    %7 = arith.addi %1, %c0_i32 : i32
    %c0 = arith.constant 0 : index
    %8 = arith.index_cast %7 : i32 to index
    %c0_0 = arith.constant 0 : index
    %c0_1 = arith.constant 0 : index
    %9 = vector.load %arg2[%c0, %8, %c0_0, %c0_1] : memref<1x10x8x16xbf16, #tpu.memory_space<vmem>>, vector<1x8x8x16xbf16>
    %10 = vector.shape_cast %9 : vector<1x8x8x16xbf16> to vector<8x8x16xbf16>
    %11 = arith.extf %10 : vector<8x8x16xbf16> to vector<8x8x16xf32>
    %c1_i32_2 = arith.constant 1 : i32
    %12 = tpu.dynamic_rotate %11 by %c1_i32_2 dim 1 : vector<8x8x16xf32>, i32 -> vector<8x8x16xf32>
    %cst = arith.constant 0.000000e+00 : f32
    %13 = vector.broadcast %cst : f32 to vector<8x8x16xf32>
    %14 = arith.select %4, %12, %13 : vector<8x8x16xi1>, vector<8x8x16xf32>
    %15 = arith.truncf %14 : vector<8x8x16xf32> to vector<8x8x16xbf16>
    %c0_3 = arith.constant 0 : index
    %c0_4 = arith.constant 0 : index
    %c0_5 = arith.constant 0 : index
    %16 = vector.load %arg9[%c0_3, %c0_4, %c0_5] : memref<8x8x144xbf16, #tpu.memory_space<vmem>>, vector<8x8x16xbf16>
    tpu.vector_store %arg9[%c0_3, %c0_4, %c0_5], %15 {strides = array<i32>} : memref<8x8x144xbf16, #tpu.memory_space<vmem>>, vector<8x8x16xbf16>,
    %c0_6 = arith.constant 0 : index
    %c0_7 = arith.constant 0 : index
    %c16 = arith.constant 16 : index
    %17 = vector.load %arg9[%c0_6, %c0_7, %c16] : memref<8x8x144xbf16, #tpu.memory_space<vmem>>, vector<8x8x16xbf16>
    tpu.vector_store %arg9[%c0_6, %c0_7, %c16], %10 {strides = array<i32>} : memref<8x8x144xbf16, #tpu.memory_space<vmem>>, vector<8x8x16xbf16>,
    %c7_i32 = arith.constant 7 : i32
    %18 = tpu.dynamic_rotate %11 by %c7_i32 dim 1 : vector<8x8x16xf32>, i32 -> vector<8x8x16xf32>
    %cst_8 = arith.constant 0.000000e+00 : f32
    %19 = vector.broadcast %cst_8 : f32 to vector<8x8x16xf32>
    %20 = arith.select %6, %18, %19 : vector<8x8x16xi1>, vector<8x8x16xf32>
    %21 = arith.truncf %20 : vector<8x8x16xf32> to vector<8x8x16xbf16>
    %c0_9 = arith.constant 0 : index
    %c0_10 = arith.constant 0 : index
    %c32 = arith.constant 32 : index
    %22 = vector.load %arg9[%c0_9, %c0_10, %c32] : memref<8x8x144xbf16, #tpu.memory_space<vmem>>, vector<8x8x16xbf16>
    tpu.vector_store %arg9[%c0_9, %c0_10, %c32], %21 {strides = array<i32>} : memref<8x8x144xbf16, #tpu.memory_space<vmem>>, vector<8x8x16xbf16>,
    %c1_i32_11 = arith.constant 1 : i32
    %23 = arith.addi %1, %c1_i32_11 : i32
    %c0_12 = arith.constant 0 : index
    %24 = arith.index_cast %23 : i32 to index
    %c0_13 = arith.constant 0 : index
    %c0_14 = arith.constant 0 : index
    %25 = vector.load %arg2[%c0_12, %24, %c0_13, %c0_14] : memref<1x10x8x16xbf16, #tpu.memory_space<vmem>>, vector<1x8x8x16xbf16>
    %26 = vector.shape_cast %25 : vector<1x8x8x16xbf16> to vector<8x8x16xbf16>
    %27 = arith.extf %26 : vector<8x8x16xbf16> to vector<8x8x16xf32>
    %c1_i32_15 = arith.constant 1 : i32
    %28 = tpu.dynamic_rotate %27 by %c1_i32_15 dim 1 : vector<8x8x16xf32>, i32 -> vector<8x8x16xf32>
    %cst_16 = arith.constant 0.000000e+00 : f32
    %29 = vector.broadcast %cst_16 : f32 to vector<8x8x16xf32>
    %30 = arith.select %4, %28, %29 : vector<8x8x16xi1>, vector<8x8x16xf32>
    %31 = arith.truncf %30 : vector<8x8x16xf32> to vector<8x8x16xbf16>
    %c0_17 = arith.constant 0 : index
    %c0_18 = arith.constant 0 : index
    %c48 = arith.constant 48 : index
    %32 = vector.load %arg9[%c0_17, %c0_18, %c48] : memref<8x8x144xbf16, #tpu.memory_space<vmem>>, vector<8x8x16xbf16>
    tpu.vector_store %arg9[%c0_17, %c0_18, %c48], %31 {strides = array<i32>} : memref<8x8x144xbf16, #tpu.memory_space<vmem>>, vector<8x8x16xbf16>,
    %c0_19 = arith.constant 0 : index
    %c0_20 = arith.constant 0 : index
    %c64 = arith.constant 64 : index
    %33 = vector.load %arg9[%c0_19, %c0_20, %c64] : memref<8x8x144xbf16, #tpu.memory_space<vmem>>, vector<8x8x16xbf16>
    tpu.vector_store %arg9[%c0_19, %c0_20, %c64], %26 {strides = array<i32>} : memref<8x8x144xbf16, #tpu.memory_space<vmem>>, vector<8x8x16xbf16>,
    %c7_i32_21 = arith.constant 7 : i32
    %34 = tpu.dynamic_rotate %27 by %c7_i32_21 dim 1 : vector<8x8x16xf32>, i32 -> vector<8x8x16xf32>
    %cst_22 = arith.constant 0.000000e+00 : f32
    %35 = vector.broadcast %cst_22 : f32 to vector<8x8x16xf32>
    %36 = arith.select %6, %34, %35 : vector<8x8x16xi1>, vector<8x8x16xf32>
    %37 = arith.truncf %36 : vector<8x8x16xf32> to vector<8x8x16xbf16>
    %c0_23 = arith.constant 0 : index
    %c0_24 = arith.constant 0 : index
    %c80 = arith.constant 80 : index
    %38 = vector.load %arg9[%c0_23, %c0_24, %c80] : memref<8x8x144xbf16, #tpu.memory_space<vmem>>, vector<8x8x16xbf16>
    tpu.vector_store %arg9[%c0_23, %c0_24, %c80], %37 {strides = array<i32>} : memref<8x8x144xbf16, #tpu.memory_space<vmem>>, vector<8x8x16xbf16>,
    %c2_i32 = arith.constant 2 : i32
    %39 = arith.addi %1, %c2_i32 : i32
    %c0_25 = arith.constant 0 : index
    %40 = arith.index_cast %39 : i32 to index
    %c0_26 = arith.constant 0 : index
    %c0_27 = arith.constant 0 : index
    %41 = vector.load %arg2[%c0_25, %40, %c0_26, %c0_27] : memref<1x10x8x16xbf16, #tpu.memory_space<vmem>>, vector<1x8x8x16xbf16>
    %42 = vector.shape_cast %41 : vector<1x8x8x16xbf16> to vector<8x8x16xbf16>
    %43 = arith.extf %42 : vector<8x8x16xbf16> to vector<8x8x16xf32>
    %c1_i32_28 = arith.constant 1 : i32
    %44 = tpu.dynamic_rotate %43 by %c1_i32_28 dim 1 : vector<8x8x16xf32>, i32 -> vector<8x8x16xf32>
    %cst_29 = arith.constant 0.000000e+00 : f32
    %45 = vector.broadcast %cst_29 : f32 to vector<8x8x16xf32>
    %46 = arith.select %4, %44, %45 : vector<8x8x16xi1>, vector<8x8x16xf32>
    %47 = arith.truncf %46 : vector<8x8x16xf32> to vector<8x8x16xbf16>
    %c0_30 = arith.constant 0 : index
    %c0_31 = arith.constant 0 : index
    %c96 = arith.constant 96 : index
    %48 = vector.load %arg9[%c0_30, %c0_31, %c96] : memref<8x8x144xbf16, #tpu.memory_space<vmem>>, vector<8x8x16xbf16>
    tpu.vector_store %arg9[%c0_30, %c0_31, %c96], %47 {strides = array<i32>} : memref<8x8x144xbf16, #tpu.memory_space<vmem>>, vector<8x8x16xbf16>,
    %c0_32 = arith.constant 0 : index
    %c0_33 = arith.constant 0 : index
    %c112 = arith.constant 112 : index
    %49 = vector.load %arg9[%c0_32, %c0_33, %c112] : memref<8x8x144xbf16, #tpu.memory_space<vmem>>, vector<8x8x16xbf16>
    tpu.vector_store %arg9[%c0_32, %c0_33, %c112], %42 {strides = array<i32>} : memref<8x8x144xbf16, #tpu.memory_space<vmem>>, vector<8x8x16xbf16>,
    %c7_i32_34 = arith.constant 7 : i32
    %50 = tpu.dynamic_rotate %43 by %c7_i32_34 dim 1 : vector<8x8x16xf32>, i32 -> vector<8x8x16xf32>
    %cst_35 = arith.constant 0.000000e+00 : f32
    %51 = vector.broadcast %cst_35 : f32 to vector<8x8x16xf32>
    %52 = arith.select %6, %50, %51 : vector<8x8x16xi1>, vector<8x8x16xf32>
    %53 = arith.truncf %52 : vector<8x8x16xf32> to vector<8x8x16xbf16>
    %c0_36 = arith.constant 0 : index
    %c0_37 = arith.constant 0 : index
    %c128 = arith.constant 128 : index
    %54 = vector.load %arg9[%c0_36, %c0_37, %c128] : memref<8x8x144xbf16, #tpu.memory_space<vmem>>, vector<8x8x16xbf16>
    tpu.vector_store %arg9[%c0_36, %c0_37, %c128], %53 {strides = array<i32>} : memref<8x8x144xbf16, #tpu.memory_space<vmem>>, vector<8x8x16xbf16>,
    %c0_38 = arith.constant 0 : index
    %c0_39 = arith.constant 0 : index
    %c0_40 = arith.constant 0 : index
    %55 = vector.load %arg9[%c0_38, %c0_39, %c0_40] : memref<8x8x144xbf16, #tpu.memory_space<vmem>>, vector<8x8x144xbf16>
    %56 = vector.shape_cast %55 : vector<8x8x144xbf16> to vector<64x144xbf16>
    %c0_41 = arith.constant 0 : index
    %c0_42 = arith.constant 0 : index
    %57 = vector.load %arg3[%c0_41, %c0_42] : memref<144x16xbf16, #tpu.memory_space<vmem>>, vector<144x16xbf16>
    %cst_43 = arith.constant dense<0.000000e+00> : vector<64x16xf32>
    %58 = tpu.matmul %56, %57, %cst_43 {dimension_numbers = #tpu.dot_dimension_numbers<[1], [0], [0], [1], [0, 0, 1, 1], [], []>} : vector<64x144xbf16>, vector<144x16xbf16>, vector<64x16xf32> -> vector<64x16xf32>
    %c0_44 = arith.constant 0 : index
    %c0_45 = arith.constant 0 : index
    %59 = vector.load %arg4[%c0_44, %c0_45] : memref<1x16xf32, #tpu.memory_space<vmem>>, vector<1x16xf32>
    %60 = vector.broadcast %59 : vector<1x16xf32> to vector<64x16xf32>
    %61 = arith.addf %58, %60 : vector<64x16xf32>
    %cst_46 = arith.constant 0.000000e+00 : f32
    %62 = vector.broadcast %cst_46 : f32 to vector<64x16xf32>
    %63 = arith.maximumf %61, %62 : vector<64x16xf32>
    %64 = arith.truncf %63 : vector<64x16xf32> to vector<64x16xbf16>
    %c0_47 = arith.constant 0 : index
    %c0_48 = arith.constant 0 : index
    %65 = vector.load %arg5[%c0_47, %c0_48] : memref<16x32xbf16, #tpu.memory_space<vmem>>, vector<16x32xbf16>
    %cst_49 = arith.constant dense<0.000000e+00> : vector<64x32xf32>
    %66 = tpu.matmul %64, %65, %cst_49 {dimension_numbers = #tpu.dot_dimension_numbers<[1], [0], [0], [1], [0, 0, 1, 1], [], []>} : vector<64x16xbf16>, vector<16x32xbf16>, vector<64x32xf32> -> vector<64x32xf32>
    %c0_50 = arith.constant 0 : index
    %c0_51 = arith.constant 0 : index
    %67 = vector.load %arg6[%c0_50, %c0_51] : memref<1x32xf32, #tpu.memory_space<vmem>>, vector<1x32xf32>
    %68 = vector.broadcast %67 : vector<1x32xf32> to vector<64x32xf32>
    %69 = arith.addf %66, %68 : vector<64x32xf32>
    %70 = vector.shape_cast %69 : vector<64x32xf32> to vector<1x8x8x32xf32>
    %71 = arith.truncf %70 : vector<1x8x8x32xf32> to vector<1x8x8x32xbf16>
    %c0_52 = arith.constant 0 : index
    %c0_53 = arith.constant 0 : index
    %c0_54 = arith.constant 0 : index
    %c0_55 = arith.constant 0 : index
    %72 = vector.load %arg7[%c0_52, %c0_53, %c0_54, %c0_55] : memref<1x8x8x32xbf16, #tpu.memory_space<vmem>>, vector<1x8x8x32xbf16>
    tpu.vector_store %arg7[%c0_52, %c0_53, %c0_54, %c0_55], %71 {strides = array<i32>} : memref<1x8x8x32xbf16, #tpu.memory_space<vmem>>, vector<1x8x8x32xbf16>,
    %cst_56 = arith.constant dense<0.000000e+00> : vector<32xf32>
    %73 = vector.multi_reduction <add>, %69, %cst_56 [0] : vector<64x32xf32> to vector<32xf32>
    %74 = vector.shape_cast %73 : vector<32xf32> to vector<1x1x1x32xf32>
    %c0_57 = arith.constant 0 : index
    %c0_58 = arith.constant 0 : index
    %c0_59 = arith.constant 0 : index
    %c0_60 = arith.constant 0 : index
    %75 = vector.load %arg8[%c0_57, %c0_58, %c0_59, %c0_60] : memref<1x1x1x32xf32, #tpu.memory_space<vmem>>, vector<1x1x1x32xf32>
    tpu.vector_store %arg8[%c0_57, %c0_58, %c0_59, %c0_60], %74 {strides = array<i32>} : memref<1x1x1x32xf32, #tpu.memory_space<vmem>>, vector<1x1x1x32xf32>,
    return
  }
  func.func @transform_0(%arg0: i32, %arg1: i32) -> (i32, i32, i32, i32) {
    %c0_i32 = arith.constant 0 : i32
    %c0_i32_0 = arith.constant 0 : i32
    %c0_i32_1 = arith.constant 0 : i32
    %c0_i32_2 = arith.constant 0 : i32
    return %arg0, %c0_i32, %c0_i32_0, %c0_i32_1 : i32, i32, i32, i32
  }
  func.func @transform_1(%arg0: i32, %arg1: i32) -> (i32, i32) {
    %c0_i32 = arith.constant 0 : i32
    %c0_i32_0 = arith.constant 0 : i32
    %c0_i32_1 = arith.constant 0 : i32
    return %c0_i32, %c0_i32_0 : i32, i32
  }
  func.func @transform_2(%arg0: i32, %arg1: i32) -> (i32, i32) {
    %c0_i32 = arith.constant 0 : i32
    %c0_i32_0 = arith.constant 0 : i32
    %c0_i32_1 = arith.constant 0 : i32
    return %c0_i32, %c0_i32_0 : i32, i32
  }
  func.func @transform_3(%arg0: i32, %arg1: i32) -> (i32, i32) {
    %c0_i32 = arith.constant 0 : i32
    %c0_i32_0 = arith.constant 0 : i32
    %c0_i32_1 = arith.constant 0 : i32
    return %c0_i32, %c0_i32_0 : i32, i32
  }
  func.func @transform_4(%arg0: i32, %arg1: i32) -> (i32, i32) {
    %c0_i32 = arith.constant 0 : i32
    %c0_i32_0 = arith.constant 0 : i32
    %c0_i32_1 = arith.constant 0 : i32
    return %c0_i32, %c0_i32_0 : i32, i32
  }
  func.func @transform_5(%arg0: i32, %arg1: i32) -> (i32, i32, i32, i32) {
    %c0_i32 = arith.constant 0 : i32
    %c0_i32_0 = arith.constant 0 : i32
    %c0_i32_1 = arith.constant 0 : i32
    return %arg0, %arg1, %c0_i32, %c0_i32_0 : i32, i32, i32, i32
  }
  func.func @transform_6(%arg0: i32, %arg1: i32) -> (i32, i32, i32, i32) {
    %c0_i32 = arith.constant 0 : i32
    %c0_i32_0 = arith.constant 0 : i32
    %c0_i32_1 = arith.constant 0 : i32
    return %arg0, %arg1, %c0_i32, %c0_i32_0 : i32, i32, i32, i32
  }
}

module attributes {stable_mosaic.version = 11 : i64} {
  func.func @_se_scale_residual_relu_kernel(%arg0: i32, %arg1: i32, %arg2: memref<1x8x8x32xbf16, #tpu.memory_space<vmem>>, %arg3: memref<1x1x32xf32, #tpu.memory_space<vmem>>, %arg4: memref<1x8x8x32xbf16, #tpu.memory_space<vmem>>, %arg5: memref<1x8x8x32xbf16, #tpu.memory_space<vmem>>) attributes {dimension_semantics = [#tpu.dimension_semantics<parallel>, #tpu.dimension_semantics<parallel>], iteration_bounds = array<i64: 2, 1>, scalar_prefetch = 0 : i64, scratch_operands = 0 : i64, tpu.core_type = #tpu.core_type<tc>, window_params = [{transform_indices = @transform_0, window_bounds = array<i64: 1, 8, 8, 32>}, {transform_indices = @transform_1, window_bounds = array<i64: 1, 1, 32>}, {transform_indices = @transform_2, window_bounds = array<i64: 1, 8, 8, 32>}, {transform_indices = @transform_3, window_bounds = array<i64: 1, 8, 8, 32>}]} {
    %c0 = arith.constant 0 : index
    %c0_0 = arith.constant 0 : index
    %c0_1 = arith.constant 0 : index
    %c0_2 = arith.constant 0 : index
    %0 = vector.load %arg2[%c0, %c0_0, %c0_1, %c0_2] : memref<1x8x8x32xbf16, #tpu.memory_space<vmem>>, vector<1x8x8x32xbf16>
    %1 = arith.extf %0 : vector<1x8x8x32xbf16> to vector<1x8x8x32xf32>
    %c0_3 = arith.constant 0 : index
    %c0_4 = arith.constant 0 : index
    %c0_5 = arith.constant 0 : index
    %2 = vector.load %arg3[%c0_3, %c0_4, %c0_5] : memref<1x1x32xf32, #tpu.memory_space<vmem>>, vector<1x1x32xf32>
    %3 = vector.shape_cast %2 : vector<1x1x32xf32> to vector<1x1x1x32xf32>
    %4 = vector.broadcast %3 : vector<1x1x1x32xf32> to vector<1x8x8x32xf32>
    %5 = arith.mulf %1, %4 : vector<1x8x8x32xf32>
    %c0_6 = arith.constant 0 : index
    %c0_7 = arith.constant 0 : index
    %c0_8 = arith.constant 0 : index
    %c0_9 = arith.constant 0 : index
    %6 = vector.load %arg4[%c0_6, %c0_7, %c0_8, %c0_9] : memref<1x8x8x32xbf16, #tpu.memory_space<vmem>>, vector<1x8x8x32xbf16>
    %7 = arith.extf %6 : vector<1x8x8x32xbf16> to vector<1x8x8x32xf32>
    %8 = arith.addf %5, %7 : vector<1x8x8x32xf32>
    %cst = arith.constant 0.000000e+00 : f32
    %9 = vector.broadcast %cst : f32 to vector<1x8x8x32xf32>
    %10 = arith.maximumf %8, %9 : vector<1x8x8x32xf32>
    %11 = arith.truncf %10 : vector<1x8x8x32xf32> to vector<1x8x8x32xbf16>
    %c0_10 = arith.constant 0 : index
    %c0_11 = arith.constant 0 : index
    %c0_12 = arith.constant 0 : index
    %c0_13 = arith.constant 0 : index
    %12 = vector.load %arg5[%c0_10, %c0_11, %c0_12, %c0_13] : memref<1x8x8x32xbf16, #tpu.memory_space<vmem>>, vector<1x8x8x32xbf16>
    tpu.vector_store %arg5[%c0_10, %c0_11, %c0_12, %c0_13], %11 {strides = array<i32>} : memref<1x8x8x32xbf16, #tpu.memory_space<vmem>>, vector<1x8x8x32xbf16>,
    return
  }
  func.func @transform_0(%arg0: i32, %arg1: i32) -> (i32, i32, i32, i32) {
    %c0_i32 = arith.constant 0 : i32
    %c0_i32_0 = arith.constant 0 : i32
    %c0_i32_1 = arith.constant 0 : i32
    return %arg0, %arg1, %c0_i32, %c0_i32_0 : i32, i32, i32, i32
  }
  func.func @transform_1(%arg0: i32, %arg1: i32) -> (i32, i32, i32) {
    %c0_i32 = arith.constant 0 : i32
    %c0_i32_0 = arith.constant 0 : i32
    %c0_i32_1 = arith.constant 0 : i32
    return %arg0, %c0_i32, %c0_i32_0 : i32, i32, i32
  }
  func.func @transform_2(%arg0: i32, %arg1: i32) -> (i32, i32, i32, i32) {
    %c0_i32 = arith.constant 0 : i32
    %c0_i32_0 = arith.constant 0 : i32
    %c0_i32_1 = arith.constant 0 : i32
    return %arg0, %arg1, %c0_i32, %c0_i32_0 : i32, i32, i32, i32
  }
  func.func @transform_3(%arg0: i32, %arg1: i32) -> (i32, i32, i32, i32) {
    %c0_i32 = arith.constant 0 : i32
    %c0_i32_0 = arith.constant 0 : i32
    %c0_i32_1 = arith.constant 0 : i32
    return %arg0, %arg1, %c0_i32, %c0_i32_0 : i32, i32, i32, i32
  }
}

</mosaic_0001>

<llo_original>
// kernel: bottleneckx_forward.3
$region0: #{bottleneckx_forward.3}
  #allocation0 [shape = 'u32[]', space=smem, size = 0x4, offset = 0x4, fixed_abs, tag = 'smem constant byte address 0x4 - core index']
  #allocation1 [shape = 'u32[144,128]{1,0:T(1,128)}', space=vmem, size = 0x12000, scoped, tag = 'internal scratch']
  %s0 = inlined_call_operand.vmem [shape: bf16[128,32], index: 0, kind: input, shape index: {}]
  %s1 = inlined_call_operand.vmem [shape: bf16[32,16], index: 1, kind: input, shape index: {}]
  %s2 = inlined_call_operand.vmem [shape: f32[1,16], index: 2, kind: input, shape index: {}]
  %s3 = inlined_call_operand.vmem [shape: bf16[128,16], index: 3, kind: output, shape index: {}]
  %s4 = sld [smem:[#allocation0]]
  $region22: #{bottleneckx_forward.3} parent=0
    _
  %s6 = ssub.s32 1, %s4
  %s7 = scalar_select 0, %s6, %s4
  // Predicated region
  $region2: #{bottleneckx_forward.3} parent=0 // pred_check
    _
  $region3: #{bottleneckx_forward.3} parent=0 // pred_check_branch
    %9 = sbr.rel (0) target = $region5
  $region4: #{bottleneckx_forward.3} parent=0 // pred_region
    _
  $region5: #{bottleneckx_forward.3} parent=0 // pred_fallthru
    _
  // Predicated region
  $region6: #{bottleneckx_forward.3} parent=0 // pred_check
    _
  $region7: #{bottleneckx_forward.3} parent=0 // pred_check_branch
    %11 = sbr.rel (0) target = $region9
  $region8: #{bottleneckx_forward.3} parent=0 // pred_region
    _
  $region9: #{bottleneckx_forward.3} parent=0 // pred_fallthru
    _
  // Predicated region
  $region10: #{bottleneckx_forward.3} parent=0 // pred_check
    _
  $region11: #{bottleneckx_forward.3} parent=0 // pred_check_branch
    %13 = sbr.rel (0) target = $region13
  $region12: #{bottleneckx_forward.3} parent=0 // pred_region
    _
  $region13: #{bottleneckx_forward.3} parent=0 // pred_fallthru
    _
  %v15 = vld [vmem:[%s0] sm:$0xf]
  %v16 = vld [vmem:[%s0 + $0x4] sm:$0xf]
  %v17 = vld [vmem:[%s0 + $0x8] sm:$0xf]
  %v18 = vld [vmem:[%s0 + $0xc] sm:$0xf]
  %v19 = vld [vmem:[%s0 + $0x10] sm:$0xf]
  %v20 = vld [vmem:[%s0 + $0x14] sm:$0xf]
  %v21 = vld [vmem:[%s0 + $0x18] sm:$0xf]
  %v22 = vld [vmem:[%s0 + $0x1c] sm:$0xf]
  %v23 = vld [vmem:[%s0 + $0x20] sm:$0xf]
  %v24 = vld [vmem:[%s0 + $0x24] sm:$0xf]
  %v25 = vld [vmem:[%s0 + $0x28] sm:$0xf]
  %v26 = vld [vmem:[%s0 + $0x2c] sm:$0xf]
  %v27 = vld [vmem:[%s0 + $0x30] sm:$0xf]
  %v28 = vld [vmem:[%s0 + $0x34] sm:$0xf]
  %v29 = vld [vmem:[%s0 + $0x38] sm:$0xf]
  %v30 = vld [vmem:[%s0 + $0x3c] sm:$0xf]
  %v31 = vld [vmem:[%s1] sm:$0xf]
  %v32 = vld [vmem:[%s1 + $0x4] sm:$0xf]
  %v33 = vld [vmem:[%s1 + $0x8] sm:$0xf]
  %v34 = vld [vmem:[%s1 + $0xc] sm:$0xf]
  %v35 = vld [vmem:[%s2] sm:$0x1]
  %v37 = vlaneseq
  %v38 = vshrl.u32 %v37, 7
  %v39 = vsub.s32 0, %v38
  %v40 = vrot.slane %v35, %v39
  %v58 = vunpack.c.l.b16 %v15
  %v59 = vunpack.c.l.b16 %v16
  %v60 = vunpack.c.l.b16 %v17
  %v61 = vunpack.c.l.b16 %v18
  %v62 = vunpack.c.l.b16 %v19
  %v63 = vunpack.c.l.b16 %v20
  %v64 = vunpack.c.l.b16 %v21
  %v65 = vunpack.c.l.b16 %v22
  %v66 = vunpack.c.l.b16 %v23
  %v67 = vunpack.c.l.b16 %v24
  %v68 = vunpack.c.l.b16 %v25
  %v69 = vunpack.c.l.b16 %v26
  %v70 = vunpack.c.l.b16 %v27
  %v71 = vunpack.c.l.b16 %v28
  %v72 = vunpack.c.l.b16 %v29
  %v73 = vunpack.c.l.b16 %v30
  %v74 = vpack.c.b16 %v59, %v58
  %v75 = vpack.c.b16 %v61, %v60
  %v76 = vpack.c.b16 %v63, %v62
  %v77 = vpack.c.b16 %v65, %v64
  %v78 = vpack.c.b16 %v67, %v66
  %v79 = vpack.c.b16 %v69, %v68
  %v80 = vpack.c.b16 %v71, %v70
  %v81 = vpack.c.b16 %v73, %v72
  %v86 = vunpack.c.l.b16 %v31
  %v87 = vunpack.c.l.b16 %v32
  %v88 = vunpack.c.l.b16 %v33
  %v89 = vunpack.c.l.b16 %v34
  %v90 = vpack.c.b16 %v87, %v86
  %v91 = vpack.c.b16 %v89, %v88
  %vm94 = vcmask 261120
  %v96 = vsel %vm94, %v74, 0
  %v99 = vsel %vm94, %v75, 0
  %v102 = vsel %vm94, %v76, 0
  %v105 = vsel %vm94, %v77, 0
  %v108 = vsel %vm94, %v78, 0
  %v111 = vsel %vm94, %v79, 0
  %v114 = vsel %vm94, %v80, 0
  %v117 = vsel %vm94, %v81, 0
  %119 = vmatprep.subr.bf16.mxu0 0
  %120 = vmatpush1.bf16.msra.mxu0 %v90
  %121 = vmatprep.subr.bf16.mxu0 0
  %122 = vmatpush1.bf16.msra.mxu0 %v91
  %123 = vmatprep.subr.bf16.mxu0 0
  %124 = vmatpush1.bf16.msra.mxu0 0
  %125 = vmatprep.subr.bf16.mxu0 0
  %126 = vmatpush1.bf16.msra.mxu0 0
  %127 = vmatprep.subr.bf16.mxu0 0
  %128 = vmatpush1.bf16.msra.mxu0 0
  %129 = vmatprep.subr.bf16.mxu0 0
  %130 = vmatpush1.bf16.msra.mxu0 0
  %131 = vmatprep.subr.bf16.mxu0 0
  %132 = vmatpush1.bf16.msra.mxu0 0
  %133 = vmatprep.subr.bf16.mxu0 0
  %134 = vmatpush1.bf16.msra.mxu0 0
  %135 = vmatprep.subr.bf16.mxu0 0
  %136 = vmatpush1.bf16.msra.mxu0 0
  %137 = vmatprep.subr.bf16.mxu0 0
  %138 = vmatpush1.bf16.msra.mxu0 0
  %139 = vmatprep.subr.bf16.mxu0 0
  %140 = vmatpush1.bf16.msra.mxu0 0
  %141 = vmatprep.subr.bf16.mxu0 0
  %142 = vmatpush1.bf16.msra.mxu0 0
  %143 = vmatprep.subr.bf16.mxu0 0
  %144 = vmatpush1.bf16.msra.mxu0 0
  %145 = vmatprep.subr.bf16.mxu0 0
  %146 = vmatpush1.bf16.msra.mxu0 0
  %147 = vmatprep.subr.bf16.mxu0 0
  %148 = vmatpush1.bf16.msra.mxu0 0
  %149 = vmatprep.subr.bf16.mxu0 0
  %150 = vmatpush1.bf16.msra.mxu0 0
  %151 = vmatprep.mubr.bf16.mxu0 0
  %152 = vmatmul.mubr.bf16.gmra.mrb[0].mxu0 %v96
  %v153 = vpop.f32.mrb[0].mxu0
  %v154 = vadd.f32 %v40, %v153
  %v155 = vpop.f32.mrb[0].mxu0
  %v156 = vpop.f32.mrb[0].mxu0
  %v157 = vadd.f32 %v40, %v156
  %v158 = vpop.f32.mrb[0].mxu0
  %159 = vmatprep.mubr.bf16.mxu0 0
  %160 = vmatmul.mubr.bf16.gmra.mrb[0].mxu0 %v99
  %v161 = vpop.f32.mrb[0].mxu0
  %v162 = vadd.f32 %v40, %v161
  %v163 = vpop.f32.mrb[0].mxu0
  %v164 = vpop.f32.mrb[0].mxu0
  %v165 = vadd.f32 %v40, %v164
  %v166 = vpop.f32.mrb[0].mxu0
  %167 = vmatprep.mubr.bf16.mxu0 0
  %168 = vmatmul.mubr.bf16.gmra.mrb[0].mxu0 %v102
  %v169 = vpop.f32.mrb[0].mxu0
  %v170 = vadd.f32 %v40, %v169
  %v171 = vpop.f32.mrb[0].mxu0
  %v172 = vpop.f32.mrb[0].mxu0
  %v173 = vadd.f32 %v40, %v172
  %v174 = vpop.f32.mrb[0].mxu0
  %175 = vmatprep.mubr.bf16.mxu0 0
  %176 = vmatmul.mubr.bf16.gmra.mrb[0].mxu0 %v105
  %v177 = vpop.f32.mrb[0].mxu0
  %v178 = vadd.f32 %v40, %v177
  %v179 = vpop.f32.mrb[0].mxu0
  %v180 = vpop.f32.mrb[0].mxu0
  %v181 = vadd.f32 %v40, %v180
  %v182 = vpop.f32.mrb[0].mxu0
  %183 = vmatprep.mubr.bf16.mxu0 0
  %184 = vmatmul.mubr.bf16.gmra.mrb[0].mxu0 %v108
  %v185 = vpop.f32.mrb[0].mxu0
  %v186 = vadd.f32 %v40, %v185
  %v187 = vpop.f32.mrb[0].mxu0
  %v188 = vpop.f32.mrb[0].mxu0
  %v189 = vadd.f32 %v40, %v188
  %v190 = vpop.f32.mrb[0].mxu0
  %191 = vmatprep.mubr.bf16.mxu0 0
  %192 = vmatmul.mubr.bf16.gmra.mrb[0].mxu0 %v111
  %v193 = vpop.f32.mrb[0].mxu0
  %v194 = vadd.f32 %v40, %v193
  %v195 = vpop.f32.mrb[0].mxu0
  %v196 = vpop.f32.mrb[0].mxu0
  %v197 = vadd.f32 %v40, %v196
  %v198 = vpop.f32.mrb[0].mxu0
  %199 = vmatprep.mubr.bf16.mxu0 0
  %200 = vmatmul.mubr.bf16.gmra.mrb[0].mxu0 %v114
  %v201 = vpop.f32.mrb[0].mxu0
  %v202 = vadd.f32 %v40, %v201
  %v203 = vpop.f32.mrb[0].mxu0
  %v204 = vpop.f32.mrb[0].mxu0
  %v205 = vadd.f32 %v40, %v204
  %v206 = vpop.f32.mrb[0].mxu0
  %207 = vmatprep.mubr.bf16.mxu0 0
  %208 = vmatmul.mubr.bf16.gmra.mrb[0].mxu0 %v117
  %v209 = vpop.f32.mrb[0].mxu0
  %v210 = vadd.f32 %v40, %v209
  %v211 = vpop.f32.mrb[0].mxu0
  %v212 = vpop.f32.mrb[0].mxu0
  %v213 = vadd.f32 %v40, %v212
  %v214 = vpop.f32.mrb[0].mxu0
  %215 = vdwg.mxu0
  %v216 = vmax.f32 %v154, 0.0
  %v217 = vmax.f32 %v157, 0.0
  %v218 = vmax.f32 %v162, 0.0
  %v219 = vmax.f32 %v165, 0.0
  %v220 = vmax.f32 %v170, 0.0
  %v221 = vmax.f32 %v173, 0.0
  %v222 = vmax.f32 %v178, 0.0
  %v223 = vmax.f32 %v181, 0.0
  %v224 = vmax.f32 %v186, 0.0
  %v225 = vmax.f32 %v189, 0.0
  %v226 = vmax.f32 %v194, 0.0
  %v227 = vmax.f32 %v197, 0.0
  %v228 = vmax.f32 %v202, 0.0
  %v229 = vmax.f32 %v205, 0.0
  %v230 = vmax.f32 %v210, 0.0
  %v231 = vmax.f32 %v213, 0.0
  %v232 = vpack.c.bf16 %v217, %v216
  %v233 = vpack.c.bf16 %v219, %v218
  %v234 = vpack.c.bf16 %v221, %v220
  %v235 = vpack.c.bf16 %v223, %v222
  %v236 = vpack.c.bf16 %v225, %v224
  %v237 = vpack.c.bf16 %v227, %v226
  %v238 = vpack.c.bf16 %v229, %v228
  %v239 = vpack.c.bf16 %v231, %v230
  %v248 = vunpack.c.l.b16 %v232
  %v249 = vunpack.c.h.b16 %v232
  %v250 = vunpack.c.l.b16 %v233
  %v251 = vunpack.c.h.b16 %v233
  %v252 = vunpack.c.l.b16 %v234
  %v253 = vunpack.c.h.b16 %v234
  %v254 = vunpack.c.l.b16 %v235
  %v255 = vunpack.c.h.b16 %v235
  %v256 = vunpack.c.l.b16 %v236
  %v257 = vunpack.c.h.b16 %v236
  %v258 = vunpack.c.l.b16 %v237
  %v259 = vunpack.c.h.b16 %v237
  %v260 = vunpack.c.l.b16 %v238
  %v261 = vunpack.c.h.b16 %v238
  %v262 = vunpack.c.l.b16 %v239
  %v263 = vunpack.c.h.b16 %v239
  %v264 = vpack.c.b16 %v248, %v248
  %v265 = vpack.c.b16 %v249, %v249
  %v266 = vpack.c.b16 %v250, %v250
  %v267 = vpack.c.b16 %v251, %v251
  %v268 = vpack.c.b16 %v252, %v252
  %v269 = vpack.c.b16 %v253, %v253
  %v270 = vpack.c.b16 %v254, %v254
  %v271 = vpack.c.b16 %v255, %v255
  %v272 = vpack.c.b16 %v256, %v256
  %v273 = vpack.c.b16 %v257, %v257
  %v274 = vpack.c.b16 %v258, %v258
  %v275 = vpack.c.b16 %v259, %v259
  %v276 = vpack.c.b16 %v260, %v260
  %v277 = vpack.c.b16 %v261, %v261
  %v278 = vpack.c.b16 %v262, %v262
  %v279 = vpack.c.b16 %v263, %v263
  %vm296 = vcmask 125952
  %297 = vst.msk [vmem:[%s3] sm:$0xf] %vm296, %v264
  %298 = vst.msk [vmem:[%s3 + $0x4] sm:$0xf] %vm296, %v265
  %299 = vst.msk [vmem:[%s3 + $0x8] sm:$0xf] %vm296, %v266
  %300 = vst.msk [vmem:[%s3 + $0xc] sm:$0xf] %vm296, %v267
  %301 = vst.msk [vmem:[%s3 + $0x10] sm:$0xf] %vm296, %v268
  %302 = vst.msk [vmem:[%s3 + $0x14] sm:$0xf] %vm296, %v269
  %303 = vst.msk [vmem:[%s3 + $0x18] sm:$0xf] %vm296, %v270
  %304 = vst.msk [vmem:[%s3 + $0x1c] sm:$0xf] %vm296, %v271
  %305 = vst.msk [vmem:[%s3 + $0x20] sm:$0xf] %vm296, %v272
  %306 = vst.msk [vmem:[%s3 + $0x24] sm:$0xf] %vm296, %v273
  %307 = vst.msk [vmem:[%s3 + $0x28] sm:$0xf] %vm296, %v274
  %308 = vst.msk [vmem:[%s3 + $0x2c] sm:$0xf] %vm296, %v275
  %309 = vst.msk [vmem:[%s3 + $0x30] sm:$0xf] %vm296, %v276
  %310 = vst.msk [vmem:[%s3 + $0x34] sm:$0xf] %vm296, %v277
  %311 = vst.msk [vmem:[%s3 + $0x38] sm:$0xf] %vm296, %v278
  %312 = vst.msk [vmem:[%s3 + $0x3c] sm:$0xf] %vm296, %v279
  // Predicated region
  $region14: #{bottleneckx_forward.3} parent=0 // pred_check
    _
  $region15: #{bottleneckx_forward.3} parent=0 // pred_check_branch
    %314 = sbr.rel (0) target = $region17
  $region16: #{bottleneckx_forward.3} parent=0 // pred_region
    _
  $region17: #{bottleneckx_forward.3} parent=0 // pred_fallthru
    _
  // Predicated region
  $region18: #{bottleneckx_forward.3} parent=0 // pred_check
    _
  $region19: #{bottleneckx_forward.3} parent=0 // pred_check_branch
    %316 = sbr.rel (0) target = $region21
  $region20: #{bottleneckx_forward.3} parent=0 // pred_region
    _
  $region21: #{bottleneckx_forward.3} parent=0 // pred_fallthru
    _

// kernel: bottleneckx_forward.5
$region0: #{bottleneckx_forward.5}
  #allocation0 [shape = 'u32[]', space=smem, size = 0x4, offset = 0x4, fixed_abs, tag = 'smem constant byte address 0x4 - core index']
  #allocation1 [shape = 'u32[144,128]{1,0:T(1,128)}', space=vmem, size = 0x12000, scoped, tag = 'internal scratch']
  %s0 = inlined_call_operand.vmem [shape: bf16[2,8,8,32], index: 0, kind: input, shape index: {}]
  %s1 = inlined_call_operand.vmem [shape: f32[2,1,32], index: 1, kind: input, shape index: {}]
  %s2 = inlined_call_operand.vmem [shape: bf16[2,8,8,32], index: 2, kind: input, shape index: {}]
  %s3 = inlined_call_operand.vmem [shape: bf16[2,8,8,32], index: 3, kind: output, shape index: {}]
  %s4 = sld [smem:[#allocation0]]
  $region45: #{bottleneckx_forward.5} parent=0
    _
  %s6 = ssub.s32 1, %s4
  %s7 = scalar_select 0, %s6, %s4
  loop: start=0, step=1, limit=4
  $region2: #{bottleneckx_forward.5} parent=0 // loop_pre_header
    _
  $region3: #{bottleneckx_forward.5} parent=0 // loop_header
    %s9 = sphi 0, %s13
    %p10 = scmp.ge.s32.totalorder %s9, 4
    %s16 = sphi 0, %s28
    %s17 = sphi 0, %s24
    %s18 = sphi 0, %s16
    %s19 = sphi 0, %s17
    %s20 = sphi 0, %s18
    %s21 = sphi 0, %s19
    %s33 = sphi 0, %s35
    %s36 = sphi 0, %s33
    %s37 = sphi 0, %s36
    %s53 = sphi 0, %s37
    %s59 = sphi 0, %s61
    %s62 = sphi 0, %s59
    %s63 = sphi 0, %s62
    %s79 = sphi 0, %s63
    %s87 = sphi 0, %s89
    %s90 = sphi 0, %s87
    %s91 = sphi 0, %s90
    %s107 = sphi 0, %s91
    %s115 = sphi 0, %s117
    %s118 = sphi 0, %s115
    %s119 = sphi 0, %s118
    %s135 = sphi 0, %s119
  $region4: #{bottleneckx_forward.5} parent=0 // loop_header_branch
    %12 = sbr.rel (%p10) target = $region8
  $region5: #{bottleneckx_forward.5} parent=0 // loop_body
    %s14 = ssub.s32 %s9, 1
    %s15 = ssub.s32 %s9, 2
    %s22 = sadd.s32 1, %s17
    %p23 = scmp.ge.s32.totalorder %s22, 1
    %s24 = scalar_select %p23, 0, %s22
    %s25 = sadd.s32 1, %s16
    %s26 = scalar_select %p23, %s25, %s16
    %p27 = scmp.ge.s32.totalorder %s26, 2
    %s28 = scalar_select %p27, 0, %s26
    %s29 = ssub.s32 %s16, %s28
    %s30 = ssub.s32 %s17, %s24
    %s31 = sor.u32 %s29, %s30
    %p32 = scmp.eq.s32.totalorder %s31, 0
    %s34 = sadd.s32 %s33, 1
    %s35 = scalar_select %p32, %s33, %s34
    %p38 = pneg %p32
    %p39 = scmp.eq.s32.totalorder %s9, 1
    %p40 = por %p38, %p39
    %p41 = scmp.ne.s32.totalorder %s33, %s36
    %p42 = scmp.eq.s32.totalorder %s9, 0
    %p43 = por %p41, %p42
    %p44 = scmp.ne.s32.totalorder %s33, %s36
    %p45 = scmp.eq.s32.totalorder %s14, 1
    %p46 = por %p44, %p45
    %p47 = scmp.ne.s32.totalorder %s36, %s37
    %p48 = scmp.eq.s32.totalorder %s14, 0
    %p49 = por %p47, %p48
    %p50 = scmp.ne.s32.totalorder %s36, %s37
    %p51 = scmp.eq.s32.totalorder %s15, 1
    %p52 = por %p50, %p51
    %p54 = scmp.ne.s32.totalorder %s37, %s53
    %p55 = scmp.eq.s32.totalorder %s15, 0
    %p56 = por %p54, %p55
    %s57 = ssub.s32 %s16, %s28
    %p58 = scmp.eq.s32.totalorder %s57, 0
    %s60 = sadd.s32 %s59, 1
    %s61 = scalar_select %p58, %s59, %s60
    %p64 = pneg %p58
    %p65 = scmp.eq.s32.totalorder %s9, 1
    %p66 = por %p64, %p65
    %p67 = scmp.ne.s32.totalorder %s59, %s62
    %p68 = scmp.eq.s32.totalorder %s9, 0
    %p69 = por %p67, %p68
    %p70 = scmp.ne.s32.totalorder %s59, %s62
    %p71 = scmp.eq.s32.totalorder %s14, 1
    %p72 = por %p70, %p71
    %p73 = scmp.ne.s32.totalorder %s62, %s63
    %p74 = scmp.eq.s32.totalorder %s14, 0
    %p75 = por %p73, %p74
    %p76 = scmp.ne.s32.totalorder %s62, %s63
    %p77 = scmp.eq.s32.totalorder %s15, 1
    %p78 = por %p76, %p77
    %p80 = scmp.ne.s32.totalorder %s63, %s79
    %p81 = scmp.eq.s32.totalorder %s15, 0
    %p82 = por %p80, %p81
    %s83 = ssub.s32 %s16, %s28
    %s84 = ssub.s32 %s17, %s24
    %s85 = sor.u32 %s83, %s84
    %p86 = scmp.eq.s32.totalorder %s85, 0
    %s88 = sadd.s32 %s87, 1
    %s89 = scalar_select %p86, %s87, %s88
    %p92 = pneg %p86
    %p93 = scmp.eq.s32.totalorder %s9, 1
    %p94 = por %p92, %p93
    %p95 = scmp.ne.s32.totalorder %s87, %s90
    %p96 = scmp.eq.s32.totalorder %s9, 0
    %p97 = por %p95, %p96
    %p98 = scmp.ne.s32.totalorder %s87, %s90
    %p99 = scmp.eq.s32.totalorder %s14, 1
    %p100 = por %p98, %p99
    %p101 = scmp.ne.s32.totalorder %s90, %s91
    %p102 = scmp.eq.s32.totalorder %s14, 0
    %p103 = por %p101, %p102
    %p104 = scmp.ne.s32.totalorder %s90, %s91
    %p105 = scmp.eq.s32.totalorder %s15, 1
    %p106 = por %p104, %p105
    %p108 = scmp.ne.s32.totalorder %s91, %s107
    %p109 = scmp.eq.s32.totalorder %s15, 0
    %p110 = por %p108, %p109
    %s111 = ssub.s32 %s16, %s28
    %s112 = ssub.s32 %s17, %s24
    %s113 = sor.u32 %s111, %s112
    %p114 = scmp.eq.s32.totalorder %s113, 0
    %s116 = sadd.s32 %s115, 1
    %s117 = scalar_select %p114, %s115, %s116
    %p120 = pneg %p114
    %p121 = scmp.eq.s32.totalorder %s9, 1
    %p122 = por %p120, %p121
    %p123 = scmp.ne.s32.totalorder %s115, %s118
    %p124 = scmp.eq.s32.totalorder %s9, 0
    %p125 = por %p123, %p124
    %p126 = scmp.ne.s32.totalorder %s115, %s118
    %p127 = scmp.eq.s32.totalorder %s14, 1
    %p128 = por %p126, %p127
    %p129 = scmp.ne.s32.totalorder %s118, %s119
    %p130 = scmp.eq.s32.totalorder %s14, 0
    %p131 = por %p129, %p130
    %p132 = scmp.ne.s32.totalorder %s118, %s119
    %p133 = scmp.eq.s32.totalorder %s15, 1
    %p134 = por %p132, %p133
    %p136 = scmp.ne.s32.totalorder %s119, %s135
    %p137 = scmp.eq.s32.totalorder %s15, 0
    %p138 = por %p136, %p137
    %p139 = scmp.le.s32.totalorder 1, %s9
    %p140 = scmp.lt.s32.totalorder %s9, 3
    %p141 = pnand %p139, %p140
    %p142 = pneg %p141
    // Predicated region
    $region9: #{bottleneckx_forward.5} parent=5 // pred_check
      _
    $region10: #{bottleneckx_forward.5} parent=5 // pred_check_branch
      %144 = sbr.rel (%p141) target = $region12
    $region11: #{bottleneckx_forward.5} parent=5 // pred_region
      %s145 = ssub.s32 %s9, 1
    $region12: #{bottleneckx_forward.5} parent=5 // pred_fallthru
      _
    %p146 = scmp.lt.s32.totalorder %s9, 2
    // Predicated region
    $region13: #{bottleneckx_forward.5} parent=5 // pred_check
      %p147 = pneg %p146
    $region14: #{bottleneckx_forward.5} parent=5 // pred_check_branch
      %149 = sbr.rel (%p147) target = $region16
    $region15: #{bottleneckx_forward.5} parent=5 // pred_region
      // Predicated region
      $region17: #{bottleneckx_forward.5} parent=15 // pred_check
        %p150 = pneg %p43
      $region18: #{bottleneckx_forward.5} parent=15 // pred_check_branch
        %152 = sbr.rel (%p150) target = $region20
      $region19: #{bottleneckx_forward.5} parent=15 // pred_region
        %s153 = smul.u32 8, %s17
        %p154 = scmp.lt.s32.totalorder %s16, 1
        %s155 = scalar_select %p154, %s16, 1
        %p156 = scmp.lt.s32.totalorder %s153, 7
        %s157 = scalar_select %p156, %s153, 7
        %s158 = smul.addr %s155, 8
        %s159 = sadd.s32 %s157, %s158
        %s160 = smul.addr %s159, 4
        %s161 = scalar_lea.vmem %s0, %s160
        %s162 = smul.u32 8, %s17
      $region20: #{bottleneckx_forward.5} parent=15 // pred_fallthru
        _
      // Predicated region
      $region21: #{bottleneckx_forward.5} parent=15 // pred_check
        %p163 = pneg %p69
      $region22: #{bottleneckx_forward.5} parent=15 // pred_check_branch
        %165 = sbr.rel (%p163) target = $region24
      $region23: #{bottleneckx_forward.5} parent=15 // pred_region
        %p166 = scmp.lt.s32.totalorder %s16, 1
        %s167 = scalar_select %p166, %s16, 1
        %s168 = scalar_lea.vmem %s1, %s167
      $region24: #{bottleneckx_forward.5} parent=15 // pred_fallthru
        _
      // Predicated region
      $region25: #{bottleneckx_forward.5} parent=15 // pred_check
        %p169 = pneg %p97
      $region26: #{bottleneckx_forward.5} parent=15 // pred_check_branch
        %171 = sbr.rel (%p169) target = $region28
      $region27: #{bottleneckx_forward.5} parent=15 // pred_region
        %s172 = smul.u32 8, %s17
        %p173 = scmp.lt.s32.totalorder %s16, 1
        %s174 = scalar_select %p173, %s16, 1
        %p175 = scmp.lt.s32.totalorder %s172, 7
        %s176 = scalar_select %p175, %s172, 7
        %s177 = smul.addr %s174, 8
        %s178 = sadd.s32 %s176, %s177
        %s179 = smul.addr %s178, 4
        %s180 = scalar_lea.vmem %s2, %s179
        %s181 = smul.u32 8, %s17
      $region28: #{bottleneckx_forward.5} parent=15 // pred_fallthru
        _
    $region16: #{bottleneckx_forward.5} parent=5 // pred_fallthru
      _
    %p182 = scmp.le.s32.totalorder 1, %s9
    %p183 = scmp.lt.s32.totalorder %s9, 3
    %p184 = pnand %p182, %p183
    %p185 = pneg %p184
    // Predicated region
    $region29: #{bottleneckx_forward.5} parent=5 // pred_check
      _
    $region30: #{bottleneckx_forward.5} parent=5 // pred_check_branch
      %187 = sbr.rel (%p184) target = $region32
    $region31: #{bottleneckx_forward.5} parent=5 // pred_region
      %s188 = ssub.s32 %s9, 1
      %s189 = smul.u32 8, %s19
      %p190 = scmp.lt.s32.totalorder %s18, 1
      %s191 = scalar_select %p190, %s18, 1
      %p192 = scmp.lt.s32.totalorder %s189, 7
      %s193 = scalar_select %p192, %s189, 7
      %s194 = smul.addr %s191, 8
      %s195 = sadd.s32 %s193, %s194
      %s196 = smul.addr %s195, 4
      %s197 = scalar_lea.vmem %s0, %s196
      %p198 = pneg %p49
      %p199 = pneg %p46
      %p200 = scmp.lt.s32.totalorder %s18, 1
      %s201 = scalar_select %p200, %s18, 1
      %s202 = scalar_lea.vmem %s1, %s201
      %p203 = pneg %p75
      %p204 = pneg %p72
      %s205 = smul.u32 8, %s19
      %p206 = scmp.lt.s32.totalorder %s18, 1
      %s207 = scalar_select %p206, %s18, 1
      %p208 = scmp.lt.s32.totalorder %s205, 7
      %s209 = scalar_select %p208, %s205, 7
      %s210 = smul.addr %s207, 8
      %s211 = sadd.s32 %s209, %s210
      %s212 = smul.addr %s211, 4
      %s213 = scalar_lea.vmem %s2, %s212
      %p214 = pneg %p103
      %p215 = pneg %p100
      %p216 = pneg %p131
      %p217 = pneg %p128
      %s218 = smul.u32 8, %s19
      %p219 = scmp.lt.s32.totalorder %s18, 1
      %s220 = scalar_select %p219, %s18, 1
      %p221 = scmp.lt.s32.totalorder %s218, 7
      %s222 = scalar_select %p221, %s218, 7
      %s223 = smul.addr %s220, 8
      %s224 = sadd.s32 %s222, %s223
      %s225 = smul.addr %s224, 4
      %s226 = scalar_lea.vmem %s3, %s225
      %s227 = smul.u32 8, %s19
      %p228 = scmp.lt.s32.totalorder %s18, 1
      %s229 = scalar_select %p228, %s18, 1
      %p230 = scmp.lt.s32.totalorder %s227, 7
      %s231 = scalar_select %p230, %s227, 7
      %s232 = smul.addr %s229, 8
      %s233 = sadd.s32 %s231, %s232
      %s234 = smul.addr %s233, 4
      %s235 = scalar_lea.vmem %s0, %s234
      %s236 = smul.u32 8, %s19
      %p237 = scmp.lt.s32.totalorder %s18, 1
      %s238 = scalar_select %p237, %s18, 1
      %s239 = scalar_lea.vmem %s1, %s238
      %s240 = smul.u32 8, %s19
      %p241 = scmp.lt.s32.totalorder %s18, 1
      %s242 = scalar_select %p241, %s18, 1
      %p243 = scmp.lt.s32.totalorder %s240, 7
      %s244 = scalar_select %p243, %s240, 7
      %s245 = smul.addr %s242, 8
      %s246 = sadd.s32 %s244, %s245
      %s247 = smul.addr %s246, 4
      %s248 = scalar_lea.vmem %s2, %s247
      %s249 = smul.u32 8, %s19
      %s250 = smul.u32 8, %s19
      %p251 = scmp.lt.s32.totalorder %s18, 1
      %s252 = scalar_select %p251, %s18, 1
      %p253 = scmp.lt.s32.totalorder %s250, 7
      %s254 = scalar_select %p253, %s250, 7
      %s255 = smul.addr %s252, 8
      %s256 = sadd.s32 %s254, %s255
      %s257 = smul.addr %s256, 4
      %s258 = scalar_lea.vmem %s3, %s257
      %s259 = smul.u32 8, %s19
      %v260 = vld [vmem:[%s235] sm:$0xf]
      %v261 = vld [vmem:[%s235 + $0x4] sm:$0xf]
      %v262 = vld [vmem:[%s235 + $0x8] sm:$0xf]
      %v263 = vld [vmem:[%s235 + $0xc] sm:$0xf]
      %v264 = vld [vmem:[%s235 + $0x10] sm:$0xf]
      %v265 = vld [vmem:[%s235 + $0x14] sm:$0xf]
      %v266 = vld [vmem:[%s235 + $0x18] sm:$0xf]
      %v267 = vld [vmem:[%s235 + $0x1c] sm:$0xf]
      %v268 = vunpack.c.l.bf16 %v260
      %v269 = vunpack.c.l.bf16 %v261
      %v270 = vunpack.c.l.bf16 %v262
      %v271 = vunpack.c.l.bf16 %v263
      %v272 = vunpack.c.l.bf16 %v264
      %v273 = vunpack.c.l.bf16 %v265
      %v274 = vunpack.c.l.bf16 %v266
      %v275 = vunpack.c.l.bf16 %v267
      %v276 = vld [vmem:[%s239] sm:$0x1]
      %v278 = vlaneseq
      %v279 = vshrl.u32 %v278, 7
      %v280 = vsub.s32 0, %v279
      %v281 = vrot.slane %v276, %v280
      %v283 = vmul.f32 %v268, %v281
      %v284 = vmul.f32 %v269, %v281
      %v285 = vmul.f32 %v270, %v281
      %v286 = vmul.f32 %v271, %v281
      %v287 = vmul.f32 %v272, %v281
      %v288 = vmul.f32 %v273, %v281
      %v289 = vmul.f32 %v274, %v281
      %v290 = vmul.f32 %v275, %v281
      %v291 = vld [vmem:[%s248] sm:$0xf]
      %v292 = vld [vmem:[%s248 + $0x4] sm:$0xf]
      %v293 = vld [vmem:[%s248 + $0x8] sm:$0xf]
      %v294 = vld [vmem:[%s248 + $0xc] sm:$0xf]
      %v295 = vld [vmem:[%s248 + $0x10] sm:$0xf]
      %v296 = vld [vmem:[%s248 + $0x14] sm:$0xf]
      %v297 = vld [vmem:[%s248 + $0x18] sm:$0xf]
      %v298 = vld [vmem:[%s248 + $0x1c] sm:$0xf]
      %v299 = vunpack.c.l.bf16 %v291
      %v300 = vunpack.c.l.bf16 %v292
      %v301 = vunpack.c.l.bf16 %v293
      %v302 = vunpack.c.l.bf16 %v294
      %v303 = vunpack.c.l.bf16 %v295
      %v304 = vunpack.c.l.bf16 %v296
      %v305 = vunpack.c.l.bf16 %v297
      %v306 = vunpack.c.l.bf16 %v298
      %v307 = vadd.f32 %v283, %v299
      %v308 = vadd.f32 %v284, %v300
      %v309 = vadd.f32 %v285, %v301
      %v310 = vadd.f32 %v286, %v302
      %v311 = vadd.f32 %v287, %v303
      %v312 = vadd.f32 %v288, %v304
      %v313 = vadd.f32 %v289, %v305
      %v314 = vadd.f32 %v290, %v306
      %v315 = vmax.f32 %v307, 0.0
      %v316 = vmax.f32 %v308, 0.0
      %v317 = vmax.f32 %v309, 0.0
      %v318 = vmax.f32 %v310, 0.0
      %v319 = vmax.f32 %v311, 0.0
      %v320 = vmax.f32 %v312, 0.0
      %v321 = vmax.f32 %v313, 0.0
      %v322 = vmax.f32 %v314, 0.0
      %v323 = vpack.c.bf16 %v315, %v315
      %v324 = vpack.c.bf16 %v316, %v316
      %v325 = vpack.c.bf16 %v317, %v317
      %v326 = vpack.c.bf16 %v318, %v318
      %v327 = vpack.c.bf16 %v319, %v319
      %v328 = vpack.c.bf16 %v320, %v320
      %v329 = vpack.c.bf16 %v321, %v321
      %v330 = vpack.c.bf16 %v322, %v322
      %vm331 = vcmask 257024
      %332 = vst.msk [vmem:[%s258] sm:$0xf] %vm331, %v323
      %333 = vst.msk [vmem:[%s258 + $0x4] sm:$0xf] %vm331, %v324
      %334 = vst.msk [vmem:[%s258 + $0x8] sm:$0xf] %vm331, %v325
      %335 = vst.msk [vmem:[%s258 + $0xc] sm:$0xf] %vm331, %v326
      %336 = vst.msk [vmem:[%s258 + $0x10] sm:$0xf] %vm331, %v327
      %337 = vst.msk [vmem:[%s258 + $0x14] sm:$0xf] %vm331, %v328
      %338 = vst.msk [vmem:[%s258 + $0x18] sm:$0xf] %vm331, %v329
      %339 = vst.msk [vmem:[%s258 + $0x1c] sm:$0xf] %vm331, %v330
      %s340 = smul.u32 8, %s19
      %p341 = scmp.lt.s32.totalorder %s18, 1
      %s342 = scalar_select %p341, %s18, 1
      %p343 = scmp.lt.s32.totalorder %s340, 7
      %s344 = scalar_select %p343, %s340, 7
      %s345 = smul.addr %s342, 8
      %s346 = sadd.s32 %s344, %s345
      %s347 = smul.addr %s346, 4
      %s348 = scalar_lea.vmem %s3, %s347
      // Predicated region
      $region33: #{bottleneckx_forward.5} parent=31 // pred_check
        %p349 = pneg %p128
      $region34: #{bottleneckx_forward.5} parent=31 // pred_check_branch
        %351 = sbr.rel (%p349) target = $region36
      $region35: #{bottleneckx_forward.5} parent=31 // pred_region
        %s352 = smul.u32 8, %s19
      $region36: #{bottleneckx_forward.5} parent=31 // pred_fallthru
        _
    $region32: #{bottleneckx_forward.5} parent=5 // pred_fallthru
      _
    %p353 = scmp.le.s32.totalorder 2, %s9
    // Predicated region
    $region37: #{bottleneckx_forward.5} parent=5 // pred_check
      %p354 = pneg %p353
    $region38: #{bottleneckx_forward.5} parent=5 // pred_check_branch
      %356 = sbr.rel (%p354) target = $region40
    $region39: #{bottleneckx_forward.5} parent=5 // pred_region
      %s357 = ssub.s32 %s9, 2
      // Predicated region
      $region41: #{bottleneckx_forward.5} parent=39 // pred_check
        %p358 = pneg %p134
      $region42: #{bottleneckx_forward.5} parent=39 // pred_check_branch
        %360 = sbr.rel (%p358) target = $region44
      $region43: #{bottleneckx_forward.5} parent=39 // pred_region
        %s361 = smul.u32 8, %s21
        %p362 = scmp.lt.s32.totalorder %s20, 1
        %s363 = scalar_select %p362, %s20, 1
        %p364 = scmp.lt.s32.totalorder %s361, 7
        %s365 = scalar_select %p364, %s361, 7
        %s366 = smul.addr %s363, 8
        %s367 = sadd.s32 %s365, %s366
        %s368 = smul.addr %s367, 4
        %s369 = scalar_lea.vmem %s3, %s368
      $region44: #{bottleneckx_forward.5} parent=39 // pred_fallthru
        _
    $region40: #{bottleneckx_forward.5} parent=5 // pred_fallthru
      _
  $region6: #{bottleneckx_forward.5} parent=0 // loop_footer
    %s13 = sadd.s32 1, %s9
  $region7: #{bottleneckx_forward.5} parent=0 // loop_footer_branch
    %8 = sbr.rel target = $region3
  $region8: #{bottleneckx_forward.5} parent=0 // loop_exit
    _

// kernel: bottleneckx_forward.4
$region0: #{bottleneckx_forward.4}
  #allocation0 [shape = 'u32[]', space=smem, size = 0x4, offset = 0x4, fixed_abs, tag = 'smem constant byte address 0x4 - core index']
  #allocation1 [shape = 'u32[144,128]{1,0:T(1,128)}', space=vmem, size = 0x12000, scoped, tag = 'internal scratch']
  #allocation2 [shape = 'bf16[8,8,144]{2,1,0:T(8,128)(2,1)}', space=vmem, size = 0x8000, scoped, tag = 'scratch operand']
  %s0 = inlined_call_operand.vmem [shape: bf16[2,10,8,16], index: 0, kind: input, shape index: {}]
  %s1 = inlined_call_operand.vmem [shape: bf16[144,16], index: 1, kind: input, shape index: {}]
  %s2 = inlined_call_operand.vmem [shape: f32[1,16], index: 2, kind: input, shape index: {}]
  %s3 = inlined_call_operand.vmem [shape: bf16[16,32], index: 3, kind: input, shape index: {}]
  %s4 = inlined_call_operand.vmem [shape: f32[1,32], index: 4, kind: input, shape index: {}]
  %s5 = inlined_call_operand.vmem [shape: bf16[2,8,8,32], index: 5, kind: output, shape index: {0}]
  %s6 = inlined_call_operand.vmem [shape: f32[2,1,1,32], index: 6, kind: output, shape index: {1}]
  %7 = xla_tuple %s5, %s6
  %s8 = sld [smem:[#allocation0]]
  $region61: #{bottleneckx_forward.4} parent=0
    _
  %s10 = ssub.s32 1, %s8
  %s11 = scalar_select 0, %s10, %s8
  loop: start=0, step=1, limit=4
  $region2: #{bottleneckx_forward.4} parent=0 // loop_pre_header
    _
  $region3: #{bottleneckx_forward.4} parent=0 // loop_header
    %s13 = sphi 0, %s17
    %p14 = scmp.ge.s32.totalorder %s13, 4
    %s20 = sphi 0, %s32
    %s21 = sphi 0, %s28
    %s22 = sphi 0, %s20
    %s23 = sphi 0, %s21
    %s24 = sphi 0, %s22
    %s25 = sphi 0, %s23
    %s35 = sphi 0, %s37
    %s38 = sphi 0, %s35
    %s39 = sphi 0, %s38
    %s55 = sphi 0, %s39
    %s59 = sphi 0, %s59
    %s61 = sphi 0, %s59
    %s62 = sphi 0, %s61
    %s76 = sphi 0, %s62
    %s80 = sphi 0, %s80
    %s82 = sphi 0, %s80
    %s83 = sphi 0, %s82
    %s97 = sphi 0, %s83
    %s101 = sphi 0, %s101
    %s103 = sphi 0, %s101
    %s104 = sphi 0, %s103
    %s118 = sphi 0, %s104
    %s122 = sphi 0, %s122
    %s124 = sphi 0, %s122
    %s125 = sphi 0, %s124
    %s139 = sphi 0, %s125
    %s147 = sphi 0, %s149
    %s150 = sphi 0, %s147
    %s151 = sphi 0, %s150
    %s167 = sphi 0, %s151
    %s175 = sphi 0, %s177
    %s178 = sphi 0, %s175
    %s179 = sphi 0, %s178
    %s195 = sphi 0, %s179
  $region4: #{bottleneckx_forward.4} parent=0 // loop_header_branch
    %16 = sbr.rel (%p14) target = $region8
  $region5: #{bottleneckx_forward.4} parent=0 // loop_body
    %s18 = ssub.s32 %s13, 1
    %s19 = ssub.s32 %s13, 2
    %s26 = sadd.s32 1, %s21
    %p27 = scmp.ge.s32.totalorder %s26, 1
    %s28 = scalar_select %p27, 0, %s26
    %s29 = sadd.s32 1, %s20
    %s30 = scalar_select %p27, %s29, %s20
    %p31 = scmp.ge.s32.totalorder %s30, 2
    %s32 = scalar_select %p31, 0, %s30
    %s33 = ssub.s32 %s20, %s32
    %p34 = scmp.eq.s32.totalorder %s33, 0
    %s36 = sadd.s32 %s35, 1
    %s37 = scalar_select %p34, %s35, %s36
    %p40 = pneg %p34
    %p41 = scmp.eq.s32.totalorder %s13, 1
    %p42 = por %p40, %p41
    %p43 = scmp.ne.s32.totalorder %s35, %s38
    %p44 = scmp.eq.s32.totalorder %s13, 0
    %p45 = por %p43, %p44
    %p46 = scmp.ne.s32.totalorder %s35, %s38
    %p47 = scmp.eq.s32.totalorder %s18, 1
    %p48 = por %p46, %p47
    %p49 = scmp.ne.s32.totalorder %s38, %s39
    %p50 = scmp.eq.s32.totalorder %s18, 0
    %p51 = por %p49, %p50
    %p52 = scmp.ne.s32.totalorder %s38, %s39
    %p53 = scmp.eq.s32.totalorder %s19, 1
    %p54 = por %p52, %p53
    %p56 = scmp.ne.s32.totalorder %s39, %s55
    %p57 = scmp.eq.s32.totalorder %s19, 0
    %p58 = por %p56, %p57
    %s60 = sadd.s32 %s59, 1
    %p63 = scmp.eq.s32.totalorder %s13, 1
    %p64 = scmp.ne.s32.totalorder %s59, %s61
    %p65 = scmp.eq.s32.totalorder %s13, 0
    %p66 = por %p64, %p65
    %p67 = scmp.ne.s32.totalorder %s59, %s61
    %p68 = scmp.eq.s32.totalorder %s18, 1
    %p69 = por %p67, %p68
    %p70 = scmp.ne.s32.totalorder %s61, %s62
    %p71 = scmp.eq.s32.totalorder %s18, 0
    %p72 = por %p70, %p71
    %p73 = scmp.ne.s32.totalorder %s61, %s62
    %p74 = scmp.eq.s32.totalorder %s19, 1
    %p75 = por %p73, %p74
    %p77 = scmp.ne.s32.totalorder %s62, %s76
    %p78 = scmp.eq.s32.totalorder %s19, 0
    %p79 = por %p77, %p78
    %s81 = sadd.s32 %s80, 1
    %p84 = scmp.eq.s32.totalorder %s13, 1
    %p85 = scmp.ne.s32.totalorder %s80, %s82
    %p86 = scmp.eq.s32.totalorder %s13, 0
    %p87 = por %p85, %p86
    %p88 = scmp.ne.s32.totalorder %s80, %s82
    %p89 = scmp.eq.s32.totalorder %s18, 1
    %p90 = por %p88, %p89
    %p91 = scmp.ne.s32.totalorder %s82, %s83
    %p92 = scmp.eq.s32.totalorder %s18, 0
    %p93 = por %p91, %p92
    %p94 = scmp.ne.s32.totalorder %s82, %s83
    %p95 = scmp.eq.s32.totalorder %s19, 1
    %p96 = por %p94, %p95
    %p98 = scmp.ne.s32.totalorder %s83, %s97
    %p99 = scmp.eq.s32.totalorder %s19, 0
    %p100 = por %p98, %p99
    %s102 = sadd.s32 %s101, 1
    %p105 = scmp.eq.s32.totalorder %s13, 1
    %p106 = scmp.ne.s32.totalorder %s101, %s103
    %p107 = scmp.eq.s32.totalorder %s13, 0
    %p108 = por %p106, %p107
    %p109 = scmp.ne.s32.totalorder %s101, %s103
    %p110 = scmp.eq.s32.totalorder %s18, 1
    %p111 = por %p109, %p110
    %p112 = scmp.ne.s32.totalorder %s103, %s104
    %p113 = scmp.eq.s32.totalorder %s18, 0
    %p114 = por %p112, %p113
    %p115 = scmp.ne.s32.totalorder %s103, %s104
    %p116 = scmp.eq.s32.totalorder %s19, 1
    %p117 = por %p115, %p116
    %p119 = scmp.ne.s32.totalorder %s104, %s118
    %p120 = scmp.eq.s32.totalorder %s19, 0
    %p121 = por %p119, %p120
    %s123 = sadd.s32 %s122, 1
    %p126 = scmp.eq.s32.totalorder %s13, 1
    %p127 = scmp.ne.s32.totalorder %s122, %s124
    %p128 = scmp.eq.s32.totalorder %s13, 0
    %p129 = por %p127, %p128
    %p130 = scmp.ne.s32.totalorder %s122, %s124
    %p131 = scmp.eq.s32.totalorder %s18, 1
    %p132 = por %p130, %p131
    %p133 = scmp.ne.s32.totalorder %s124, %s125
    %p134 = scmp.eq.s32.totalorder %s18, 0
    %p135 = por %p133, %p134
    %p136 = scmp.ne.s32.totalorder %s124, %s125
    %p137 = scmp.eq.s32.totalorder %s19, 1
    %p138 = por %p136, %p137
    %p140 = scmp.ne.s32.totalorder %s125, %s139
    %p141 = scmp.eq.s32.totalorder %s19, 0
    %p142 = por %p140, %p141
    %s143 = ssub.s32 %s20, %s32
    %s144 = ssub.s32 %s21, %s28
    %s145 = sor.u32 %s143, %s144
    %p146 = scmp.eq.s32.totalorder %s145, 0
    %s148 = sadd.s32 %s147, 1
    %s149 = scalar_select %p146, %s147, %s148
    %p152 = pneg %p146
    %p153 = scmp.eq.s32.totalorder %s13, 1
    %p154 = por %p152, %p153
    %p155 = scmp.ne.s32.totalorder %s147, %s150
    %p156 = scmp.eq.s32.totalorder %s13, 0
    %p157 = por %p155, %p156
    %p158 = scmp.ne.s32.totalorder %s147, %s150
    %p159 = scmp.eq.s32.totalorder %s18, 1
    %p160 = por %p158, %p159
    %p161 = scmp.ne.s32.totalorder %s150, %s151
    %p162 = scmp.eq.s32.totalorder %s18, 0
    %p163 = por %p161, %p162
    %p164 = scmp.ne.s32.totalorder %s150, %s151
    %p165 = scmp.eq.s32.totalorder %s19, 1
    %p166 = por %p164, %p165
    %p168 = scmp.ne.s32.totalorder %s151, %s167
    %p169 = scmp.eq.s32.totalorder %s19, 0
    %p170 = por %p168, %p169
    %s171 = ssub.s32 %s20, %s32
    %s172 = ssub.s32 %s21, %s28
    %s173 = sor.u32 %s171, %s172
    %p174 = scmp.eq.s32.totalorder %s173, 0
    %s176 = sadd.s32 %s175, 1
    %s177 = scalar_select %p174, %s175, %s176
    %p180 = pneg %p174
    %p181 = scmp.eq.s32.totalorder %s13, 1
    %p182 = por %p180, %p181
    %p183 = scmp.ne.s32.totalorder %s175, %s178
    %p184 = scmp.eq.s32.totalorder %s13, 0
    %p185 = por %p183, %p184
    %p186 = scmp.ne.s32.totalorder %s175, %s178
    %p187 = scmp.eq.s32.totalorder %s18, 1
    %p188 = por %p186, %p187
    %p189 = scmp.ne.s32.totalorder %s178, %s179
    %p190 = scmp.eq.s32.totalorder %s18, 0
    %p191 = por %p189, %p190
    %p192 = scmp.ne.s32.totalorder %s178, %s179
    %p193 = scmp.eq.s32.totalorder %s19, 1
    %p194 = por %p192, %p193
    %p196 = scmp.ne.s32.totalorder %s179, %s195
    %p197 = scmp.eq.s32.totalorder %s19, 0
    %p198 = por %p196, %p197
    %p199 = scmp.le.s32.totalorder 1, %s13
    %p200 = scmp.lt.s32.totalorder %s13, 3
    %p201 = pnand %p199, %p200
    %p202 = pneg %p201
    // Predicated region
    $region9: #{bottleneckx_forward.4} parent=5 // pred_check
      _
    $region10: #{bottleneckx_forward.4} parent=5 // pred_check_branch
      %204 = sbr.rel (%p201) target = $region12
    $region11: #{bottleneckx_forward.4} parent=5 // pred_region
      %s205 = ssub.s32 %s13, 1
      // Predicated region
      $region13: #{bottleneckx_forward.4} parent=11 // pred_check
        %p206 = pneg %p72
      $region14: #{bottleneckx_forward.4} parent=11 // pred_check_branch
        %208 = sbr.rel (%p206) target = $region16
      $region15: #{bottleneckx_forward.4} parent=11 // pred_region
        _
      $region16: #{bottleneckx_forward.4} parent=11 // pred_fallthru
        _
      // Predicated region
      $region17: #{bottleneckx_forward.4} parent=11 // pred_check
        %p209 = pneg %p93
      $region18: #{bottleneckx_forward.4} parent=11 // pred_check_branch
        %211 = sbr.rel (%p209) target = $region20
      $region19: #{bottleneckx_forward.4} parent=11 // pred_region
        _
      $region20: #{bottleneckx_forward.4} parent=11 // pred_fallthru
        _
      // Predicated region
      $region21: #{bottleneckx_forward.4} parent=11 // pred_check
        %p212 = pneg %p114
      $region22: #{bottleneckx_forward.4} parent=11 // pred_check_branch
        %214 = sbr.rel (%p212) target = $region24
      $region23: #{bottleneckx_forward.4} parent=11 // pred_region
        _
      $region24: #{bottleneckx_forward.4} parent=11 // pred_fallthru
        _
      // Predicated region
      $region25: #{bottleneckx_forward.4} parent=11 // pred_check
        %p215 = pneg %p135
      $region26: #{bottleneckx_forward.4} parent=11 // pred_check_branch
        %217 = sbr.rel (%p215) target = $region28
      $region27: #{bottleneckx_forward.4} parent=11 // pred_region
        _
      $region28: #{bottleneckx_forward.4} parent=11 // pred_fallthru
        _
    $region12: #{bottleneckx_forward.4} parent=5 // pred_fallthru
      _
    %p218 = scmp.lt.s32.totalorder %s13, 2
    // Predicated region
    $region29: #{bottleneckx_forward.4} parent=5 // pred_check
      %p219 = pneg %p218
    $region30: #{bottleneckx_forward.4} parent=5 // pred_check_branch
      %221 = sbr.rel (%p219) target = $region32
    $region31: #{bottleneckx_forward.4} parent=5 // pred_region
      // Predicated region
      $region33: #{bottleneckx_forward.4} parent=31 // pred_check
        %p222 = pneg %p45
      $region34: #{bottleneckx_forward.4} parent=31 // pred_check_branch
        %224 = sbr.rel (%p222) target = $region36
      $region35: #{bottleneckx_forward.4} parent=31 // pred_region
        %p225 = scmp.lt.s32.totalorder %s20, 1
        %s226 = scalar_select %p225, %s20, 1
        %s227 = smul.addr %s226, 10
        %s228 = smul.addr %s227, 4
        %s229 = scalar_lea.vmem %s0, %s228
      $region36: #{bottleneckx_forward.4} parent=31 // pred_fallthru
        _
    $region32: #{bottleneckx_forward.4} parent=5 // pred_fallthru
      _
    %p230 = scmp.le.s32.totalorder 1, %s13
    %p231 = scmp.lt.s32.totalorder %s13, 3
    %p232 = pnand %p230, %p231
    %p233 = pneg %p232
    // Predicated region
    $region37: #{bottleneckx_forward.4} parent=5 // pred_check
      _
    $region38: #{bottleneckx_forward.4} parent=5 // pred_check_branch
      %235 = sbr.rel (%p232) target = $region40
    $region39: #{bottleneckx_forward.4} parent=5 // pred_region
      %s236 = ssub.s32 %s13, 1
      %p237 = scmp.lt.s32.totalorder %s22, 1
      %s238 = scalar_select %p237, %s22, 1
      %s239 = smul.addr %s238, 10
      %s240 = smul.addr %s239, 4
      %s241 = scalar_lea.vmem %s0, %s240
      %p242 = pneg %p51
      %p243 = pneg %p48
      %p244 = pneg %p72
      %p245 = pneg %p69
      %p246 = pneg %p93
      %p247 = pneg %p90
      %p248 = pneg %p114
      %p249 = pneg %p111
      %p250 = pneg %p135
      %p251 = pneg %p132
      %p252 = pneg %p163
      %p253 = pneg %p160
      %s254 = smul.u32 8, %s23
      %p255 = scmp.lt.s32.totalorder %s22, 1
      %s256 = scalar_select %p255, %s22, 1
      %p257 = scmp.lt.s32.totalorder %s254, 7
      %s258 = scalar_select %p257, %s254, 7
      %s259 = smul.addr %s256, 8
      %s260 = sadd.s32 %s258, %s259
      %s261 = smul.addr %s260, 4
      %s262 = scalar_lea.vmem %s5, %s261
      %p263 = pneg %p191
      %p264 = pneg %p188
      %p265 = scmp.lt.s32.totalorder %s22, 1
      %s266 = scalar_select %p265, %s22, 1
      %p267 = scmp.lt.s32.totalorder %s23, 0
      %s268 = scalar_select %p267, %s23, 0
      %s269 = sadd.s32 %s268, %s266
      %s270 = scalar_lea.vmem %s6, %s269
      %p271 = scmp.lt.s32.totalorder %s22, 1
      %s272 = scalar_select %p271, %s22, 1
      %s273 = smul.addr %s272, 10
      %s274 = smul.addr %s273, 4
      %s275 = scalar_lea.vmem %s0, %s274
      %s276 = smul.u32 8, %s23
      %p277 = scmp.lt.s32.totalorder %s22, 1
      %s278 = scalar_select %p277, %s22, 1
      %p279 = scmp.lt.s32.totalorder %s276, 7
      %s280 = scalar_select %p279, %s276, 7
      %s281 = smul.addr %s278, 8
      %s282 = sadd.s32 %s280, %s281
      %s283 = smul.addr %s282, 4
      %s284 = scalar_lea.vmem %s5, %s283
      %s285 = smul.u32 8, %s23
      %p286 = scmp.lt.s32.totalorder %s22, 1
      %s287 = scalar_select %p286, %s22, 1
      %p288 = scmp.lt.s32.totalorder %s23, 0
      %s289 = scalar_select %p288, %s23, 0
      %s290 = sadd.s32 %s289, %s287
      %s291 = scalar_lea.vmem %s6, %s290
      %s293 = smul.u32 %s23, 8
      %v294 = vlaneseq
      %v295 = vshrl.u32 %v294, 7
      %vm296 = vcmp.ge.s32.totalorder %v295, 1
      %vm297 = vcmp.le.s32.totalorder %v295, 6
      %s298 = smul.addr %s293, 4
      %s299 = scalar_lea.vmem %s275, %s298
      %v300 = vld [vmem:[%s299] sm:$0xf]
      %v301 = vld [vmem:[%s299 + $0x4] sm:$0xf]
      %v302 = vld [vmem:[%s299 + $0x8] sm:$0xf]
      %v303 = vld [vmem:[%s299 + $0xc] sm:$0xf]
      %v304 = vld [vmem:[%s299 + $0x10] sm:$0xf]
      %v305 = vld [vmem:[%s299 + $0x14] sm:$0xf]
      %v306 = vld [vmem:[%s299 + $0x18] sm:$0xf]
      %v307 = vld [vmem:[%s299 + $0x1c] sm:$0xf]
      %v308 = vunpack.c.l.bf16 %v300
      %v309 = vunpack.c.l.bf16 %v301
      %v310 = vunpack.c.l.bf16 %v302
      %v311 = vunpack.c.l.bf16 %v303
      %v312 = vunpack.c.l.bf16 %v304
      %v313 = vunpack.c.l.bf16 %v305
      %v314 = vunpack.c.l.bf16 %v306
      %v315 = vunpack.c.l.bf16 %v307
      %v316 = vrot.slane %v308, 7
      %v317 = vrot.slane %v309, 7
      %v318 = vrot.slane %v310, 7
      %v319 = vrot.slane %v311, 7
      %v320 = vrot.slane %v312, 7
      %v321 = vrot.slane %v313, 7
      %v322 = vrot.slane %v314, 7
      %v323 = vrot.slane %v315, 7
      %v324 = vsel %vm296, %v316, 0.0
      %v325 = vsel %vm296, %v317, 0.0
      %v326 = vsel %vm296, %v318, 0.0
      %v327 = vsel %vm296, %v319, 0.0
      %v328 = vsel %vm296, %v320, 0.0
      %v329 = vsel %vm296, %v321, 0.0
      %v330 = vsel %vm296, %v322, 0.0
      %v331 = vsel %vm296, %v323, 0.0
      %v332 = vpack.c.bf16 %v324, %v324
      %v333 = vpack.c.bf16 %v325, %v325
      %v334 = vpack.c.bf16 %v326, %v326
      %v335 = vpack.c.bf16 %v327, %v327
      %v336 = vpack.c.bf16 %v328, %v328
      %v337 = vpack.c.bf16 %v329, %v329
      %v338 = vpack.c.bf16 %v330, %v330
      %v339 = vpack.c.bf16 %v331, %v331
      %vm340 = vcmask 125952
      %341 = vst.msk [vmem:[#allocation2] sm:$0xf] %vm340, %v332
      %342 = vst.msk [vmem:[#allocation2 + $0x8] sm:$0xf] %vm340, %v333
      %343 = vst.msk [vmem:[#allocation2 + $0x10] sm:$0xf] %vm340, %v334
      %344 = vst.msk [vmem:[#allocation2 + $0x18] sm:$0xf] %vm340, %v335
      %345 = vst.msk [vmem:[#allocation2 + $0x20] sm:$0xf] %vm340, %v336
      %346 = vst.msk [vmem:[#allocation2 + $0x28] sm:$0xf] %vm340, %v337
      %347 = vst.msk [vmem:[#allocation2 + $0x30] sm:$0xf] %vm340, %v338
      %348 = vst.msk [vmem:[#allocation2 + $0x38] sm:$0xf] %vm340, %v339
      %357 = vrot.lane.b32.xlu0 %v300, 16
      %v358 = vpop.permute.xlu0 %357
      %359 = vrot.lane.b32.xlu0 %v301, 16
      %v360 = vpop.permute.xlu0 %359
      %361 = vrot.lane.b32.xlu0 %v302, 16
      %v362 = vpop.permute.xlu0 %361
      %363 = vrot.lane.b32.xlu0 %v303, 16
      %v364 = vpop.permute.xlu0 %363
      %365 = vrot.lane.b32.xlu0 %v304, 16
      %v366 = vpop.permute.xlu0 %365
      %367 = vrot.lane.b32.xlu0 %v305, 16
      %v368 = vpop.permute.xlu0 %367
      %369 = vrot.lane.b32.xlu0 %v306, 16
      %v370 = vpop.permute.xlu0 %369
      %371 = vrot.lane.b32.xlu0 %v307, 16
      %v372 = vpop.permute.xlu0 %371
      %vm381 = vcmask 257152
      %382 = vst.msk [vmem:[#allocation2] sm:$0xf] %vm381, %v358
      %383 = vst.msk [vmem:[#allocation2 + $0x8] sm:$0xf] %vm381, %v360
      %384 = vst.msk [vmem:[#allocation2 + $0x10] sm:$0xf] %vm381, %v362
      %385 = vst.msk [vmem:[#allocation2 + $0x18] sm:$0xf] %vm381, %v364
      %386 = vst.msk [vmem:[#allocation2 + $0x20] sm:$0xf] %vm381, %v366
      %387 = vst.msk [vmem:[#allocation2 + $0x28] sm:$0xf] %vm381, %v368
      %388 = vst.msk [vmem:[#allocation2 + $0x30] sm:$0xf] %vm381, %v370
      %389 = vst.msk [vmem:[#allocation2 + $0x38] sm:$0xf] %vm381, %v372
      %v390 = vrot.slane %v308, 1
      %v391 = vrot.slane %v309, 1
      %v392 = vrot.slane %v310, 1
      %v393 = vrot.slane %v311, 1
      %v394 = vrot.slane %v312, 1
      %v395 = vrot.slane %v313, 1
      %v396 = vrot.slane %v314, 1
      %v397 = vrot.slane %v315, 1
      %v398 = vsel %vm297, %v390, 0.0
      %v399 = vsel %vm297, %v391, 0.0
      %v400 = vsel %vm297, %v392, 0.0
      %v401 = vsel %vm297, %v393, 0.0
      %v402 = vsel %vm297, %v394, 0.0
      %v403 = vsel %vm297, %v395, 0.0
      %v404 = vsel %vm297, %v396, 0.0
      %v405 = vsel %vm297, %v397, 0.0
      %v406 = vpack.c.bf16 %v398, %v398
      %v407 = vpack.c.bf16 %v399, %v399
      %v408 = vpack.c.bf16 %v400, %v400
      %v409 = vpack.c.bf16 %v401, %v401
      %v410 = vpack.c.bf16 %v402, %v402
      %v411 = vpack.c.bf16 %v403, %v403
      %v412 = vpack.c.bf16 %v404, %v404
      %v413 = vpack.c.bf16 %v405, %v405
      %v422 = vunpack.c.l.b16 %v406
      %v423 = vunpack.c.l.b16 %v407
      %v424 = vunpack.c.l.b16 %v408
      %v425 = vunpack.c.l.b16 %v409
      %v426 = vunpack.c.l.b16 %v410
      %v427 = vunpack.c.l.b16 %v411
      %v428 = vunpack.c.l.b16 %v412
      %v429 = vunpack.c.l.b16 %v413
      %v430 = vpack.c.b16 %v422, %v422
      %v431 = vpack.c.b16 %v423, %v423
      %v432 = vpack.c.b16 %v424, %v424
      %v433 = vpack.c.b16 %v425, %v425
      %v434 = vpack.c.b16 %v426, %v426
      %v435 = vpack.c.b16 %v427, %v427
      %v436 = vpack.c.b16 %v428, %v428
      %v437 = vpack.c.b16 %v429, %v429
      %438 = vrot.lane.b32.xlu0 %v430, 32
      %v439 = vpop.permute.xlu0 %438
      %440 = vrot.lane.b32.xlu0 %v431, 32
      %v441 = vpop.permute.xlu0 %440
      %442 = vrot.lane.b32.xlu0 %v432, 32
      %v443 = vpop.permute.xlu0 %442
      %444 = vrot.lane.b32.xlu0 %v433, 32
      %v445 = vpop.permute.xlu0 %444
      %446 = vrot.lane.b32.xlu0 %v434, 32
      %v447 = vpop.permute.xlu0 %446
      %448 = vrot.lane.b32.xlu0 %v435, 32
      %v449 = vpop.permute.xlu0 %448
      %450 = vrot.lane.b32.xlu0 %v436, 32
      %v451 = vpop.permute.xlu0 %450
      %452 = vrot.lane.b32.xlu0 %v437, 32
      %v453 = vpop.permute.xlu0 %452
      %vm462 = vcmask 388352
      %463 = vst.msk [vmem:[#allocation2] sm:$0xf] %vm462, %v439
      %464 = vst.msk [vmem:[#allocation2 + $0x8] sm:$0xf] %vm462, %v441
      %465 = vst.msk [vmem:[#allocation2 + $0x10] sm:$0xf] %vm462, %v443
      %466 = vst.msk [vmem:[#allocation2 + $0x18] sm:$0xf] %vm462, %v445
      %467 = vst.msk [vmem:[#allocation2 + $0x20] sm:$0xf] %vm462, %v447
      %468 = vst.msk [vmem:[#allocation2 + $0x28] sm:$0xf] %vm462, %v449
      %469 = vst.msk [vmem:[#allocation2 + $0x30] sm:$0xf] %vm462, %v451
      %470 = vst.msk [vmem:[#allocation2 + $0x38] sm:$0xf] %vm462, %v453
      %s471 = sadd.s32 %s293, 1
      %s472 = smul.addr %s471, 4
      %s473 = scalar_lea.vmem %s275, %s472
      %v474 = vld [vmem:[%s473] sm:$0xf]
      %v475 = vld [vmem:[%s473 + $0x4] sm:$0xf]
      %v476 = vld [vmem:[%s473 + $0x8] sm:$0xf]
      %v477 = vld [vmem:[%s473 + $0xc] sm:$0xf]
      %v478 = vld [vmem:[%s473 + $0x10] sm:$0xf]
      %v479 = vld [vmem:[%s473 + $0x14] sm:$0xf]
      %v480 = vld [vmem:[%s473 + $0x18] sm:$0xf]
      %v481 = vld [vmem:[%s473 + $0x1c] sm:$0xf]
      %v482 = vunpack.c.l.bf16 %v474
      %v483 = vunpack.c.l.bf16 %v475
      %v484 = vunpack.c.l.bf16 %v476
      %v485 = vunpack.c.l.bf16 %v477
      %v486 = vunpack.c.l.bf16 %v478
      %v487 = vunpack.c.l.bf16 %v479
      %v488 = vunpack.c.l.bf16 %v480
      %v489 = vunpack.c.l.bf16 %v481
      %v490 = vrot.slane %v482, 7
      %v491 = vrot.slane %v483, 7
      %v492 = vrot.slane %v484, 7
      %v493 = vrot.slane %v485, 7
      %v494 = vrot.slane %v486, 7
      %v495 = vrot.slane %v487, 7
      %v496 = vrot.slane %v488, 7
      %v497 = vrot.slane %v489, 7
      %v498 = vsel %vm296, %v490, 0.0
      %v499 = vsel %vm296, %v491, 0.0
      %v500 = vsel %vm296, %v492, 0.0
      %v501 = vsel %vm296, %v493, 0.0
      %v502 = vsel %vm296, %v494, 0.0
      %v503 = vsel %vm296, %v495, 0.0
      %v504 = vsel %vm296, %v496, 0.0
      %v505 = vsel %vm296, %v497, 0.0
      %v506 = vpack.c.bf16 %v498, %v498
      %v507 = vpack.c.bf16 %v499, %v499
      %v508 = vpack.c.bf16 %v500, %v500
      %v509 = vpack.c.bf16 %v501, %v501
      %v510 = vpack.c.bf16 %v502, %v502
      %v511 = vpack.c.bf16 %v503, %v503
      %v512 = vpack.c.bf16 %v504, %v504
      %v513 = vpack.c.bf16 %v505, %v505
      %v522 = vunpack.c.l.b16 %v506
      %v523 = vunpack.c.l.b16 %v507
      %v524 = vunpack.c.l.b16 %v508
      %v525 = vunpack.c.l.b16 %v509
      %v526 = vunpack.c.l.b16 %v510
      %v527 = vunpack.c.l.b16 %v511
      %v528 = vunpack.c.l.b16 %v512
      %v529 = vunpack.c.l.b16 %v513
      %v530 = vpack.c.b16 %v522, %v522
      %v531 = vpack.c.b16 %v523, %v523
      %v532 = vpack.c.b16 %v524, %v524
      %v533 = vpack.c.b16 %v525, %v525
      %v534 = vpack.c.b16 %v526, %v526
      %v535 = vpack.c.b16 %v527, %v527
      %v536 = vpack.c.b16 %v528, %v528
      %v537 = vpack.c.b16 %v529, %v529
      %538 = vrot.lane.b32.xlu0 %v530, 48
      %v539 = vpop.permute.xlu0 %538
      %540 = vrot.lane.b32.xlu0 %v531, 48
      %v541 = vpop.permute.xlu0 %540
      %542 = vrot.lane.b32.xlu0 %v532, 48
      %v543 = vpop.permute.xlu0 %542
      %544 = vrot.lane.b32.xlu0 %v533, 48
      %v545 = vpop.permute.xlu0 %544
      %546 = vrot.lane.b32.xlu0 %v534, 48
      %v547 = vpop.permute.xlu0 %546
      %548 = vrot.lane.b32.xlu0 %v535, 48
      %v549 = vpop.permute.xlu0 %548
      %550 = vrot.lane.b32.xlu0 %v536, 48
      %v551 = vpop.permute.xlu0 %550
      %552 = vrot.lane.b32.xlu0 %v537, 48
      %v553 = vpop.permute.xlu0 %552
      %vm562 = vcmask 519552
      %563 = vst.msk [vmem:[#allocation2] sm:$0xf] %vm562, %v539
      %564 = vst.msk [vmem:[#allocation2 + $0x8] sm:$0xf] %vm562, %v541
      %565 = vst.msk [vmem:[#allocation2 + $0x10] sm:$0xf] %vm562, %v543
      %566 = vst.msk [vmem:[#allocation2 + $0x18] sm:$0xf] %vm562, %v545
      %567 = vst.msk [vmem:[#allocation2 + $0x20] sm:$0xf] %vm562, %v547
      %568 = vst.msk [vmem:[#allocation2 + $0x28] sm:$0xf] %vm562, %v549
      %569 = vst.msk [vmem:[#allocation2 + $0x30] sm:$0xf] %vm562, %v551
      %570 = vst.msk [vmem:[#allocation2 + $0x38] sm:$0xf] %vm562, %v553
      %579 = vrot.lane.b32.xlu0 %v474, 64
      %v580 = vpop.permute.xlu0 %579
      %581 = vrot.lane.b32.xlu0 %v475, 64
      %v582 = vpop.permute.xlu0 %581
      %583 = vrot.lane.b32.xlu0 %v476, 64
      %v584 = vpop.permute.xlu0 %583
      %585 = vrot.lane.b32.xlu0 %v477, 64
      %v586 = vpop.permute.xlu0 %585
      %587 = vrot.lane.b32.xlu0 %v478, 64
      %v588 = vpop.permute.xlu0 %587
      %589 = vrot.lane.b32.xlu0 %v479, 64
      %v590 = vpop.permute.xlu0 %589
      %591 = vrot.lane.b32.xlu0 %v480, 64
      %v592 = vpop.permute.xlu0 %591
      %593 = vrot.lane.b32.xlu0 %v481, 64
      %v594 = vpop.permute.xlu0 %593
      %vm603 = vcmask 650752
      %604 = vst.msk [vmem:[#allocation2] sm:$0xf] %vm603, %v580
      %605 = vst.msk [vmem:[#allocation2 + $0x8] sm:$0xf] %vm603, %v582
      %606 = vst.msk [vmem:[#allocation2 + $0x10] sm:$0xf] %vm603, %v584
      %607 = vst.msk [vmem:[#allocation2 + $0x18] sm:$0xf] %vm603, %v586
      %608 = vst.msk [vmem:[#allocation2 + $0x20] sm:$0xf] %vm603, %v588
      %609 = vst.msk [vmem:[#allocation2 + $0x28] sm:$0xf] %vm603, %v590
      %610 = vst.msk [vmem:[#allocation2 + $0x30] sm:$0xf] %vm603, %v592
      %611 = vst.msk [vmem:[#allocation2 + $0x38] sm:$0xf] %vm603, %v594
      %v612 = vrot.slane %v482, 1
      %v613 = vrot.slane %v483, 1
      %v614 = vrot.slane %v484, 1
      %v615 = vrot.slane %v485, 1
      %v616 = vrot.slane %v486, 1
      %v617 = vrot.slane %v487, 1
      %v618 = vrot.slane %v488, 1
      %v619 = vrot.slane %v489, 1
      %v620 = vsel %vm297, %v612, 0.0
      %v621 = vsel %vm297, %v613, 0.0
      %v622 = vsel %vm297, %v614, 0.0
      %v623 = vsel %vm297, %v615, 0.0
      %v624 = vsel %vm297, %v616, 0.0
      %v625 = vsel %vm297, %v617, 0.0
      %v626 = vsel %vm297, %v618, 0.0
      %v627 = vsel %vm297, %v619, 0.0
      %v628 = vpack.c.bf16 %v620, %v620
      %v629 = vpack.c.bf16 %v621, %v621
      %v630 = vpack.c.bf16 %v622, %v622
      %v631 = vpack.c.bf16 %v623, %v623
      %v632 = vpack.c.bf16 %v624, %v624
      %v633 = vpack.c.bf16 %v625, %v625
      %v634 = vpack.c.bf16 %v626, %v626
      %v635 = vpack.c.bf16 %v627, %v627
      %v644 = vunpack.c.l.b16 %v628
      %v645 = vunpack.c.l.b16 %v629
      %v646 = vunpack.c.l.b16 %v630
      %v647 = vunpack.c.l.b16 %v631
      %v648 = vunpack.c.l.b16 %v632
      %v649 = vunpack.c.l.b16 %v633
      %v650 = vunpack.c.l.b16 %v634
      %v651 = vunpack.c.l.b16 %v635
      %v652 = vpack.c.b16 %v644, %v644
      %v653 = vpack.c.b16 %v645, %v645
      %v654 = vpack.c.b16 %v646, %v646
      %v655 = vpack.c.b16 %v647, %v647
      %v656 = vpack.c.b16 %v648, %v648
      %v657 = vpack.c.b16 %v649, %v649
      %v658 = vpack.c.b16 %v650, %v650
      %v659 = vpack.c.b16 %v651, %v651
      %660 = vrot.lane.b32.xlu0 %v652, 80
      %v661 = vpop.permute.xlu0 %660
      %662 = vrot.lane.b32.xlu0 %v653, 80
      %v663 = vpop.permute.xlu0 %662
      %664 = vrot.lane.b32.xlu0 %v654, 80
      %v665 = vpop.permute.xlu0 %664
      %666 = vrot.lane.b32.xlu0 %v655, 80
      %v667 = vpop.permute.xlu0 %666
      %668 = vrot.lane.b32.xlu0 %v656, 80
      %v669 = vpop.permute.xlu0 %668
      %670 = vrot.lane.b32.xlu0 %v657, 80
      %v671 = vpop.permute.xlu0 %670
      %672 = vrot.lane.b32.xlu0 %v658, 80
      %v673 = vpop.permute.xlu0 %672
      %674 = vrot.lane.b32.xlu0 %v659, 80
      %v675 = vpop.permute.xlu0 %674
      %vm684 = vcmask 781952
      %685 = vst.msk [vmem:[#allocation2] sm:$0xf] %vm684, %v661
      %686 = vst.msk [vmem:[#allocation2 + $0x8] sm:$0xf] %vm684, %v663
      %687 = vst.msk [vmem:[#allocation2 + $0x10] sm:$0xf] %vm684, %v665
      %688 = vst.msk [vmem:[#allocation2 + $0x18] sm:$0xf] %vm684, %v667
      %689 = vst.msk [vmem:[#allocation2 + $0x20] sm:$0xf] %vm684, %v669
      %690 = vst.msk [vmem:[#allocation2 + $0x28] sm:$0xf] %vm684, %v671
      %691 = vst.msk [vmem:[#allocation2 + $0x30] sm:$0xf] %vm684, %v673
      %692 = vst.msk [vmem:[#allocation2 + $0x38] sm:$0xf] %vm684, %v675
      %s693 = sadd.s32 %s293, 2
      %s694 = smul.addr %s693, 4
      %s695 = scalar_lea.vmem %s275, %s694
      %v696 = vld [vmem:[%s695] sm:$0xf]
      %v697 = vld [vmem:[%s695 + $0x4] sm:$0xf]
      %v698 = vld [vmem:[%s695 + $0x8] sm:$0xf]
      %v699 = vld [vmem:[%s695 + $0xc] sm:$0xf]
      %v700 = vld [vmem:[%s695 + $0x10] sm:$0xf]
      %v701 = vld [vmem:[%s695 + $0x14] sm:$0xf]
      %v702 = vld [vmem:[%s695 + $0x18] sm:$0xf]
      %v703 = vld [vmem:[%s695 + $0x1c] sm:$0xf]
      %v704 = vunpack.c.l.bf16 %v696
      %v705 = vunpack.c.l.bf16 %v697
      %v706 = vunpack.c.l.bf16 %v698
      %v707 = vunpack.c.l.bf16 %v699
      %v708 = vunpack.c.l.bf16 %v700
      %v709 = vunpack.c.l.bf16 %v701
      %v710 = vunpack.c.l.bf16 %v702
      %v711 = vunpack.c.l.bf16 %v703
      %v712 = vrot.slane %v704, 7
      %v713 = vrot.slane %v705, 7
      %v714 = vrot.slane %v706, 7
      %v715 = vrot.slane %v707, 7
      %v716 = vrot.slane %v708, 7
      %v717 = vrot.slane %v709, 7
      %v718 = vrot.slane %v710, 7
      %v719 = vrot.slane %v711, 7
      %v720 = vsel %vm296, %v712, 0.0
      %v721 = vsel %vm296, %v713, 0.0
      %v722 = vsel %vm296, %v714, 0.0
      %v723 = vsel %vm296, %v715, 0.0
      %v724 = vsel %vm296, %v716, 0.0
      %v725 = vsel %vm296, %v717, 0.0
      %v726 = vsel %vm296, %v718, 0.0
      %v727 = vsel %vm296, %v719, 0.0
      %v728 = vpack.c.bf16 %v720, %v720
      %v729 = vpack.c.bf16 %v721, %v721
      %v730 = vpack.c.bf16 %v722, %v722
      %v731 = vpack.c.bf16 %v723, %v723
      %v732 = vpack.c.bf16 %v724, %v724
      %v733 = vpack.c.bf16 %v725, %v725
      %v734 = vpack.c.bf16 %v726, %v726
      %v735 = vpack.c.bf16 %v727, %v727
      %v744 = vunpack.c.l.b16 %v728
      %v745 = vunpack.c.l.b16 %v729
      %v746 = vunpack.c.l.b16 %v730
      %v747 = vunpack.c.l.b16 %v731
      %v748 = vunpack.c.l.b16 %v732
      %v749 = vunpack.c.l.b16 %v733
      %v750 = vunpack.c.l.b16 %v734
      %v751 = vunpack.c.l.b16 %v735
      %v752 = vpack.c.b16 %v744, %v744
      %v753 = vpack.c.b16 %v745, %v745
      %v754 = vpack.c.b16 %v746, %v746
      %v755 = vpack.c.b16 %v747, %v747
      %v756 = vpack.c.b16 %v748, %v748
      %v757 = vpack.c.b16 %v749, %v749
      %v758 = vpack.c.b16 %v750, %v750
      %v759 = vpack.c.b16 %v751, %v751
      %760 = vrot.lane.b32.xlu0 %v752, 96
      %v761 = vpop.permute.xlu0 %760
      %762 = vrot.lane.b32.xlu0 %v753, 96
      %v763 = vpop.permute.xlu0 %762
      %764 = vrot.lane.b32.xlu0 %v754, 96
      %v765 = vpop.permute.xlu0 %764
      %766 = vrot.lane.b32.xlu0 %v755, 96
      %v767 = vpop.permute.xlu0 %766
      %768 = vrot.lane.b32.xlu0 %v756, 96
      %v769 = vpop.permute.xlu0 %768
      %770 = vrot.lane.b32.xlu0 %v757, 96
      %v771 = vpop.permute.xlu0 %770
      %772 = vrot.lane.b32.xlu0 %v758, 96
      %v773 = vpop.permute.xlu0 %772
      %774 = vrot.lane.b32.xlu0 %v759, 96
      %v775 = vpop.permute.xlu0 %774
      %vm784 = vcmask 913152
      %785 = vst.msk [vmem:[#allocation2] sm:$0xf] %vm784, %v761
      %786 = vst.msk [vmem:[#allocation2 + $0x8] sm:$0xf] %vm784, %v763
      %787 = vst.msk [vmem:[#allocation2 + $0x10] sm:$0xf] %vm784, %v765
      %788 = vst.msk [vmem:[#allocation2 + $0x18] sm:$0xf] %vm784, %v767
      %789 = vst.msk [vmem:[#allocation2 + $0x20] sm:$0xf] %vm784, %v769
      %790 = vst.msk [vmem:[#allocation2 + $0x28] sm:$0xf] %vm784, %v771
      %791 = vst.msk [vmem:[#allocation2 + $0x30] sm:$0xf] %vm784, %v773
      %792 = vst.msk [vmem:[#allocation2 + $0x38] sm:$0xf] %vm784, %v775
      %801 = vrot.lane.b32.xlu0 %v696, 112
      %v802 = vpop.permute.xlu0 %801
      %803 = vrot.lane.b32.xlu0 %v697, 112
      %v804 = vpop.permute.xlu0 %803
      %805 = vrot.lane.b32.xlu0 %v698, 112
      %v806 = vpop.permute.xlu0 %805
      %807 = vrot.lane.b32.xlu0 %v699, 112
      %v808 = vpop.permute.xlu0 %807
      %809 = vrot.lane.b32.xlu0 %v700, 112
      %v810 = vpop.permute.xlu0 %809
      %811 = vrot.lane.b32.xlu0 %v701, 112
      %v812 = vpop.permute.xlu0 %811
      %813 = vrot.lane.b32.xlu0 %v702, 112
      %v814 = vpop.permute.xlu0 %813
      %815 = vrot.lane.b32.xlu0 %v703, 112
      %v816 = vpop.permute.xlu0 %815
      %vm825 = vcmask 1044352
      %826 = vst.msk [vmem:[#allocation2] sm:$0xf] %vm825, %v802
      %827 = vst.msk [vmem:[#allocation2 + $0x8] sm:$0xf] %vm825, %v804
      %828 = vst.msk [vmem:[#allocation2 + $0x10] sm:$0xf] %vm825, %v806
      %829 = vst.msk [vmem:[#allocation2 + $0x18] sm:$0xf] %vm825, %v808
      %830 = vst.msk [vmem:[#allocation2 + $0x20] sm:$0xf] %vm825, %v810
      %831 = vst.msk [vmem:[#allocation2 + $0x28] sm:$0xf] %vm825, %v812
      %832 = vst.msk [vmem:[#allocation2 + $0x30] sm:$0xf] %vm825, %v814
      %833 = vst.msk [vmem:[#allocation2 + $0x38] sm:$0xf] %vm825, %v816
      %v834 = vrot.slane %v704, 1
      %v835 = vrot.slane %v705, 1
      %v836 = vrot.slane %v706, 1
      %v837 = vrot.slane %v707, 1
      %v838 = vrot.slane %v708, 1
      %v839 = vrot.slane %v709, 1
      %v840 = vrot.slane %v710, 1
      %v841 = vrot.slane %v711, 1
      %v842 = vsel %vm297, %v834, 0.0
      %v843 = vsel %vm297, %v835, 0.0
      %v844 = vsel %vm297, %v836, 0.0
      %v845 = vsel %vm297, %v837, 0.0
      %v846 = vsel %vm297, %v838, 0.0
      %v847 = vsel %vm297, %v839, 0.0
      %v848 = vsel %vm297, %v840, 0.0
      %v849 = vsel %vm297, %v841, 0.0
      %v850 = vpack.c.bf16 %v842, %v842
      %v851 = vpack.c.bf16 %v843, %v843
      %v852 = vpack.c.bf16 %v844, %v844
      %v853 = vpack.c.bf16 %v845, %v845
      %v854 = vpack.c.bf16 %v846, %v846
      %v855 = vpack.c.bf16 %v847, %v847
      %v856 = vpack.c.bf16 %v848, %v848
      %v857 = vpack.c.bf16 %v849, %v849
      %858 = vst.msk [vmem:[#allocation2 + $0x4] sm:$0xf] %vm340, %v850
      %859 = vst.msk [vmem:[#allocation2 + $0xc] sm:$0xf] %vm340, %v851
      %860 = vst.msk [vmem:[#allocation2 + $0x14] sm:$0xf] %vm340, %v852
      %861 = vst.msk [vmem:[#allocation2 + $0x1c] sm:$0xf] %vm340, %v853
      %862 = vst.msk [vmem:[#allocation2 + $0x24] sm:$0xf] %vm340, %v854
      %863 = vst.msk [vmem:[#allocation2 + $0x2c] sm:$0xf] %vm340, %v855
      %864 = vst.msk [vmem:[#allocation2 + $0x34] sm:$0xf] %vm340, %v856
      %865 = vst.msk [vmem:[#allocation2 + $0x3c] sm:$0xf] %vm340, %v857
      %v866 = vld [vmem:[#allocation2] sm:$0xff]
      %v867 = vld [vmem:[#allocation2 + $0x8] sm:$0xff]
      %v868 = vld [vmem:[#allocation2 + $0x10] sm:$0xff]
      %v869 = vld [vmem:[#allocation2 + $0x18] sm:$0xff]
      %v870 = vld [vmem:[#allocation2 + $0x20] sm:$0xff]
      %v871 = vld [vmem:[#allocation2 + $0x28] sm:$0xff]
      %v872 = vld [vmem:[#allocation2 + $0x30] sm:$0xff]
      %v873 = vld [vmem:[#allocation2 + $0x38] sm:$0xff]
      %v874 = vld [vmem:[%s1] sm:$0xf]
      %v875 = vld [vmem:[%s1 + $0x4] sm:$0xf]
      %v876 = vld [vmem:[%s1 + $0x8] sm:$0xf]
      %v877 = vld [vmem:[%s1 + $0xc] sm:$0xf]
      %v878 = vld [vmem:[%s1 + $0x10] sm:$0xf]
      %v879 = vld [vmem:[%s1 + $0x14] sm:$0xf]
      %v880 = vld [vmem:[%s1 + $0x18] sm:$0xf]
      %v881 = vld [vmem:[%s1 + $0x1c] sm:$0xf]
      %v882 = vld [vmem:[%s1 + $0x20] sm:$0xf]
      %v883 = vld [vmem:[%s1 + $0x24] sm:$0xf]
      %v884 = vld [vmem:[%s1 + $0x28] sm:$0xf]
      %v885 = vld [vmem:[%s1 + $0x2c] sm:$0xf]
      %v886 = vld [vmem:[%s1 + $0x30] sm:$0xf]
      %v887 = vld [vmem:[%s1 + $0x34] sm:$0xf]
      %v888 = vld [vmem:[%s1 + $0x38] sm:$0xf]
      %v889 = vld [vmem:[%s1 + $0x3c] sm:$0xf]
      %v890 = vld [vmem:[%s1 + $0x40] sm:$0xf]
      %v891 = vld [vmem:[%s1 + $0x44] sm:$0xf]
      %v892 = vld [vmem:[%s2] sm:$0x1]
      %v894 = vlaneseq
      %v895 = vshrl.u32 %v894, 7
      %v896 = vsub.s32 0, %v895
      %v897 = vrot.slane %v892, %v896
      %v907 = vunpack.c.l.b16 %v866
      %v908 = vunpack.c.h.b16 %v866
      %v909 = vunpack.c.l.b16 %v867
      %v910 = vunpack.c.h.b16 %v867
      %v911 = vunpack.c.l.b16 %v868
      %v912 = vunpack.c.h.b16 %v868
      %v913 = vunpack.c.l.b16 %v869
      %v914 = vunpack.c.h.b16 %v869
      %v915 = vunpack.c.l.b16 %v870
      %v916 = vunpack.c.h.b16 %v870
      %v917 = vunpack.c.l.b16 %v871
      %v918 = vunpack.c.h.b16 %v871
      %v919 = vunpack.c.l.b16 %v872
      %v920 = vunpack.c.h.b16 %v872
      %v921 = vunpack.c.l.b16 %v873
      %v922 = vunpack.c.h.b16 %v873
      %v923 = vpack.c.b16 %v909, %v907
      %v924 = vpack.c.b16 %v910, %v908
      %v925 = vpack.c.b16 %v913, %v911
      %v926 = vpack.c.b16 %v914, %v912
      %v927 = vpack.c.b16 %v917, %v915
      %v928 = vpack.c.b16 %v918, %v916
      %v929 = vpack.c.b16 %v921, %v919
      %v930 = vpack.c.b16 %v922, %v920
      %v953 = vunpack.c.l.b16 %v874
      %v954 = vunpack.c.l.b16 %v875
      %v955 = vunpack.c.l.b16 %v876
      %v956 = vunpack.c.l.b16 %v877
      %v957 = vunpack.c.l.b16 %v878
      %v958 = vunpack.c.l.b16 %v879
      %v959 = vunpack.c.l.b16 %v880
      %v960 = vunpack.c.l.b16 %v881
      %v961 = vunpack.c.l.b16 %v882
      %v962 = vunpack.c.l.b16 %v883
      %v963 = vunpack.c.l.b16 %v884
      %v964 = vunpack.c.l.b16 %v885
      %v965 = vunpack.c.l.b16 %v886
      %v966 = vunpack.c.l.b16 %v887
      %v967 = vunpack.c.l.b16 %v888
      %v968 = vunpack.c.l.b16 %v889
      %v969 = vunpack.c.l.b16 %v890
      %v970 = vunpack.c.l.b16 %v891
      %v971 = vpack.c.b16 %v954, %v953
      %v972 = vpack.c.b16 %v956, %v955
      %v973 = vpack.c.b16 %v958, %v957
      %v974 = vpack.c.b16 %v960, %v959
      %v975 = vpack.c.b16 %v962, %v961
      %v976 = vpack.c.b16 %v964, %v963
      %v977 = vpack.c.b16 %v966, %v965
      %v978 = vpack.c.b16 %v968, %v967
      %v979 = vpack.c.b16 %v970, %v969
      %vm989 = vcmask 130048
      %v991 = vsel %vm989, %v924, 0
      %v994 = vsel %vm989, %v926, 0
      %v997 = vsel %vm989, %v928, 0
      %v1000 = vsel %vm989, %v930, 0
      %1002 = vmatprep.subr.bf16.mxu0 0
      %1003 = vmatpush1.bf16.msra.mxu0 %v971
      %1004 = vmatprep.subr.bf16.mxu0 0
      %1005 = vmatpush1.bf16.msra.mxu0 %v972
      %1006 = vmatprep.subr.bf16.mxu0 0
      %1007 = vmatpush1.bf16.msra.mxu0 %v973
      %1008 = vmatprep.subr.bf16.mxu0 0
      %1009 = vmatpush1.bf16.msra.mxu0 %v974
      %1010 = vmatprep.subr.bf16.mxu0 0
      %1011 = vmatpush1.bf16.msra.mxu0 %v975
      %1012 = vmatprep.subr.bf16.mxu0 0
      %1013 = vmatpush1.bf16.msra.mxu0 %v976
      %1014 = vmatprep.subr.bf16.mxu0 0
      %1015 = vmatpush1.bf16.msra.mxu0 %v977
      %1016 = vmatprep.subr.bf16.mxu0 0
      %1017 = vmatpush1.bf16.msra.mxu0 %v978
      %1018 = vmatprep.subr.bf16.mxu0 0
      %1019 = vmatpush1.bf16.msra.mxu0 %v979
      %1020 = vmatprep.subr.bf16.mxu0 0
      %1021 = vmatpush1.bf16.msra.mxu0 0
      %1022 = vmatprep.subr.bf16.mxu0 0
      %1023 = vmatpush1.bf16.msra.mxu0 0
      %1024 = vmatprep.subr.bf16.mxu0 0
      %1025 = vmatpush1.bf16.msra.mxu0 0
      %1026 = vmatprep.subr.bf16.mxu0 0
      %1027 = vmatpush1.bf16.msra.mxu0 0
      %1028 = vmatprep.subr.bf16.mxu0 0
      %1029 = vmatpush1.bf16.msra.mxu0 0
      %1030 = vmatprep.subr.bf16.mxu0 0
      %1031 = vmatpush1.bf16.msra.mxu0 0
      %1032 = vmatprep.subr.bf16.mxu0 0
      %1033 = vmatpush1.bf16.msra.mxu0 0
      %1034 = vmatprep.mubr.bf16.mxu0 %v991
      %1035 = vmatmul.mubr.bf16.gmra.mrb[0].mxu0 %v923
      %v1036 = vpop.f32.mrb[0].mxu0
      %v1037 = vadd.f32 %v897, %v1036
      %v1038 = vpop.f32.mrb[0].mxu0
      %v1039 = vpop.f32.mrb[0].mxu0
      %v1040 = vadd.f32 %v897, %v1039
      %v1041 = vpop.f32.mrb[0].mxu0
      %1042 = vmatprep.mubr.bf16.mxu0 %v994
      %1043 = vmatmul.mubr.bf16.gmra.mrb[0].mxu0 %v925
      %v1044 = vpop.f32.mrb[0].mxu0
      %v1045 = vadd.f32 %v897, %v1044
      %v1046 = vpop.f32.mrb[0].mxu0
      %v1047 = vpop.f32.mrb[0].mxu0
      %v1048 = vadd.f32 %v897, %v1047
      %v1049 = vpop.f32.mrb[0].mxu0
      %1050 = vmatprep.mubr.bf16.mxu0 %v997
      %1051 = vmatmul.mubr.bf16.gmra.mrb[0].mxu0 %v927
      %v1052 = vpop.f32.mrb[0].mxu0
      %v1053 = vadd.f32 %v897, %v1052
      %v1054 = vpop.f32.mrb[0].mxu0
      %v1055 = vpop.f32.mrb[0].mxu0
      %v1056 = vadd.f32 %v897, %v1055
      %v1057 = vpop.f32.mrb[0].mxu0
      %1058 = vmatprep.mubr.bf16.mxu0 %v1000
      %1059 = vmatmul.mubr.bf16.gmra.mrb[0].mxu0 %v929
      %v1060 = vpop.f32.mrb[0].mxu0
      %v1061 = vadd.f32 %v897, %v1060
      %v1062 = vpop.f32.mrb[0].mxu0
      %v1063 = vpop.f32.mrb[0].mxu0
      %v1064 = vadd.f32 %v897, %v1063
      %v1065 = vpop.f32.mrb[0].mxu0
      %1066 = vdwg.mxu0
      %v1067 = vmax.f32 %v1037, 0.0
      %v1068 = vmax.f32 %v1040, 0.0
      %v1069 = vmax.f32 %v1045, 0.0
      %v1070 = vmax.f32 %v1048, 0.0
      %v1071 = vmax.f32 %v1053, 0.0
      %v1072 = vmax.f32 %v1056, 0.0
      %v1073 = vmax.f32 %v1061, 0.0
      %v1074 = vmax.f32 %v1064, 0.0
      %v1075 = vpack.c.bf16 %v1068, %v1067
      %v1076 = vpack.c.bf16 %v1070, %v1069
      %v1077 = vpack.c.bf16 %v1072, %v1071
      %v1078 = vpack.c.bf16 %v1074, %v1073
      %v1079 = vld [vmem:[%s3] sm:$0xf]
      %v1080 = vld [vmem:[%s3 + $0x4] sm:$0xf]
      %v1081 = vld [vmem:[%s4] sm:$0x1]
      %v1083 = vlaneseq
      %v1084 = vshrl.u32 %v1083, 7
      %v1085 = vsub.s32 0, %v1084
      %v1086 = vrot.slane %v1081, %v1085
      %v1090 = vunpack.c.l.b16 %v1079
      %v1091 = vunpack.c.l.b16 %v1080
      %v1092 = vpack.c.b16 %v1091, %v1090
      %v1095 = vsel %vm989, %v1075, 0
      %v1098 = vsel %vm989, %v1076, 0
      %v1101 = vsel %vm989, %v1077, 0
      %v1104 = vsel %vm989, %v1078, 0
      %1106 = vmatprep.subr.bf16.mxu0 0
      %1107 = vmatpush1.bf16.msra.mxu0 %v1092
      %1108 = vmatprep.subr.bf16.mxu0 0
      %1109 = vmatpush1.bf16.msra.mxu0 0
      %1110 = vmatprep.subr.bf16.mxu0 0
      %1111 = vmatpush1.bf16.msra.mxu0 0
      %1112 = vmatprep.subr.bf16.mxu0 0
      %1113 = vmatpush1.bf16.msra.mxu0 0
      %1114 = vmatprep.subr.bf16.mxu0 0
      %1115 = vmatpush1.bf16.msra.mxu0 0
      %1116 = vmatprep.subr.bf16.mxu0 0
      %1117 = vmatpush1.bf16.msra.mxu0 0
      %1118 = vmatprep.subr.bf16.mxu0 0
      %1119 = vmatpush1.bf16.msra.mxu0 0
      %1120 = vmatprep.subr.bf16.mxu0 0
      %1121 = vmatpush1.bf16.msra.mxu0 0
      %1122 = vmatprep.subr.bf16.mxu0 0
      %1123 = vmatpush1.bf16.msra.mxu0 0
      %1124 = vmatprep.subr.bf16.mxu0 0
      %1125 = vmatpush1.bf16.msra.mxu0 0
      %1126 = vmatprep.subr.bf16.mxu0 0
      %1127 = vmatpush1.bf16.msra.mxu0 0
      %1128 = vmatprep.subr.bf16.mxu0 0
      %1129 = vmatpush1.bf16.msra.mxu0 0
      %1130 = vmatprep.subr.bf16.mxu0 0
      %1131 = vmatpush1.bf16.msra.mxu0 0
      %1132 = vmatprep.subr.bf16.mxu0 0
      %1133 = vmatpush1.bf16.msra.mxu0 0
      %1134 = vmatprep.subr.bf16.mxu0 0
      %1135 = vmatpush1.bf16.msra.mxu0 0
      %1136 = vmatprep.subr.bf16.mxu0 0
      %1137 = vmatpush1.bf16.msra.mxu0 0
      %1138 = vmatprep.mubr.bf16.mxu0 0
      %1139 = vmatmul.mubr.bf16.gmra.mrb[0].mxu0 %v1095
      %v1140 = vpop.f32.mrb[0].mxu0
      %v1141 = vadd.f32 %v1086, %v1140
      %v1142 = vpop.f32.mrb[0].mxu0
      %v1143 = vpop.f32.mrb[0].mxu0
      %v1144 = vadd.f32 %v1086, %v1143
      %v1145 = vpop.f32.mrb[0].mxu0
      %1146 = vmatprep.mubr.bf16.mxu0 0
      %1147 = vmatmul.mubr.bf16.gmra.mrb[0].mxu0 %v1098
      %v1148 = vpop.f32.mrb[0].mxu0
      %v1149 = vadd.f32 %v1086, %v1148
      %v1150 = vpop.f32.mrb[0].mxu0
      %v1151 = vpop.f32.mrb[0].mxu0
      %v1152 = vadd.f32 %v1086, %v1151
      %v1153 = vpop.f32.mrb[0].mxu0
      %1154 = vmatprep.mubr.bf16.mxu0 0
      %1155 = vmatmul.mubr.bf16.gmra.mrb[0].mxu0 %v1101
      %v1156 = vpop.f32.mrb[0].mxu0
      %v1157 = vadd.f32 %v1086, %v1156
      %v1158 = vpop.f32.mrb[0].mxu0
      %v1159 = vpop.f32.mrb[0].mxu0
      %v1160 = vadd.f32 %v1086, %v1159
      %v1161 = vpop.f32.mrb[0].mxu0
      %1162 = vmatprep.mubr.bf16.mxu0 0
      %1163 = vmatmul.mubr.bf16.gmra.mrb[0].mxu0 %v1104
      %v1164 = vpop.f32.mrb[0].mxu0
      %v1165 = vadd.f32 %v1086, %v1164
      %v1166 = vpop.f32.mrb[0].mxu0
      %v1167 = vpop.f32.mrb[0].mxu0
      %v1168 = vadd.f32 %v1086, %v1167
      %v1169 = vpop.f32.mrb[0].mxu0
      %1170 = vdwg.mxu0
      %v1171 = vpack.c.bf16 %v1141, %v1141
      %v1172 = vpack.c.bf16 %v1144, %v1144
      %v1173 = vpack.c.bf16 %v1149, %v1149
      %v1174 = vpack.c.bf16 %v1152, %v1152
      %v1175 = vpack.c.bf16 %v1157, %v1157
      %v1176 = vpack.c.bf16 %v1160, %v1160
      %v1177 = vpack.c.bf16 %v1165, %v1165
      %v1178 = vpack.c.bf16 %v1168, %v1168
      %vm1179 = vcmask 257024
      %1180 = vst.msk [vmem:[%s284] sm:$0xf] %vm1179, %v1171
      %1181 = vst.msk [vmem:[%s284 + $0x4] sm:$0xf] %vm1179, %v1172
      %1182 = vst.msk [vmem:[%s284 + $0x8] sm:$0xf] %vm1179, %v1173
      %1183 = vst.msk [vmem:[%s284 + $0xc] sm:$0xf] %vm1179, %v1174
      %1184 = vst.msk [vmem:[%s284 + $0x10] sm:$0xf] %vm1179, %v1175
      %1185 = vst.msk [vmem:[%s284 + $0x14] sm:$0xf] %vm1179, %v1176
      %1186 = vst.msk [vmem:[%s284 + $0x18] sm:$0xf] %vm1179, %v1177
      %1187 = vst.msk [vmem:[%s284 + $0x1c] sm:$0xf] %vm1179, %v1178
      %vm1188 = vcmask 261120
      %v1189 = vsel %vm1188, %v1141, 0.0
      %v1190 = vsel %vm1188, %v1144, 0.0
      %v1191 = vadd.f32 %v1189, %v1190
      %v1192 = vsel %vm1188, %v1149, 0.0
      %v1193 = vadd.f32 %v1191, %v1192
      %v1194 = vsel %vm1188, %v1152, 0.0
      %v1195 = vadd.f32 %v1193, %v1194
      %v1196 = vsel %vm1188, %v1157, 0.0
      %v1197 = vadd.f32 %v1195, %v1196
      %v1198 = vsel %vm1188, %v1160, 0.0
      %v1199 = vadd.f32 %v1197, %v1198
      %v1200 = vsel %vm1188, %v1165, 0.0
      %v1201 = vadd.f32 %v1199, %v1200
      %v1202 = vsel %vm1188, %v1168, 0.0
      %v1203 = vadd.f32 %v1201, %v1202
      %v1204 = vrot.slane %v1203, 4
      %v1205 = vadd.f32 %v1203, %v1204
      %v1206 = vrot.slane %v1205, 2
      %v1207 = vadd.f32 %v1205, %v1206
      %v1208 = vrot.slane %v1207, 1
      %v1209 = vadd.f32 %v1207, %v1208
      %vm1210 = vcmask 253952
      %1211 = vst.msk [vmem:[%s291] sm:$0x1] %vm1210, %v1209
      %s1212 = smul.u32 8, %s23
      %p1213 = scmp.lt.s32.totalorder %s22, 1
      %s1214 = scalar_select %p1213, %s22, 1
      %p1215 = scmp.lt.s32.totalorder %s1212, 7
      %s1216 = scalar_select %p1215, %s1212, 7
      %s1217 = smul.addr %s1214, 8
      %s1218 = sadd.s32 %s1216, %s1217
      %s1219 = smul.addr %s1218, 4
      %s1220 = scalar_lea.vmem %s5, %s1219
      %p1221 = scmp.lt.s32.totalorder %s22, 1
      %s1222 = scalar_select %p1221, %s22, 1
      %p1223 = scmp.lt.s32.totalorder %s23, 0
      %s1224 = scalar_select %p1223, %s23, 0
      %s1225 = sadd.s32 %s1224, %s1222
      %s1226 = scalar_lea.vmem %s6, %s1225
      // Predicated region
      $region41: #{bottleneckx_forward.4} parent=39 // pred_check
        %p1227 = pneg %p160
      $region42: #{bottleneckx_forward.4} parent=39 // pred_check_branch
        %1229 = sbr.rel (%p1227) target = $region44
      $region43: #{bottleneckx_forward.4} parent=39 // pred_region
        %s1230 = smul.u32 8, %s23
      $region44: #{bottleneckx_forward.4} parent=39 // pred_fallthru
        _
      // Predicated region
      $region45: #{bottleneckx_forward.4} parent=39 // pred_check
        %p1231 = pneg %p188
      $region46: #{bottleneckx_forward.4} parent=39 // pred_check_branch
        %1233 = sbr.rel (%p1231) target = $region48
      $region47: #{bottleneckx_forward.4} parent=39 // pred_region
        _
      $region48: #{bottleneckx_forward.4} parent=39 // pred_fallthru
        _
    $region40: #{bottleneckx_forward.4} parent=5 // pred_fallthru
      _
    %p1234 = scmp.le.s32.totalorder 2, %s13
    // Predicated region
    $region49: #{bottleneckx_forward.4} parent=5 // pred_check
      %p1235 = pneg %p1234
    $region50: #{bottleneckx_forward.4} parent=5 // pred_check_branch
      %1237 = sbr.rel (%p1235) target = $region52
    $region51: #{bottleneckx_forward.4} parent=5 // pred_region
      %s1238 = ssub.s32 %s13, 2
      // Predicated region
      $region53: #{bottleneckx_forward.4} parent=51 // pred_check
        %p1239 = pneg %p166
      $region54: #{bottleneckx_forward.4} parent=51 // pred_check_branch
        %1241 = sbr.rel (%p1239) target = $region56
      $region55: #{bottleneckx_forward.4} parent=51 // pred_region
        %s1242 = smul.u32 8, %s25
        %p1243 = scmp.lt.s32.totalorder %s24, 1
        %s1244 = scalar_select %p1243, %s24, 1
        %p1245 = scmp.lt.s32.totalorder %s1242, 7
        %s1246 = scalar_select %p1245, %s1242, 7
        %s1247 = smul.addr %s1244, 8
        %s1248 = sadd.s32 %s1246, %s1247
        %s1249 = smul.addr %s1248, 4
        %s1250 = scalar_lea.vmem %s5, %s1249
      $region56: #{bottleneckx_forward.4} parent=51 // pred_fallthru
        _
      // Predicated region
      $region57: #{bottleneckx_forward.4} parent=51 // pred_check
        %p1251 = pneg %p194
      $region58: #{bottleneckx_forward.4} parent=51 // pred_check_branch
        %1253 = sbr.rel (%p1251) target = $region60
      $region59: #{bottleneckx_forward.4} parent=51 // pred_region
        %p1254 = scmp.lt.s32.totalorder %s24, 1
        %s1255 = scalar_select %p1254, %s24, 1
        %p1256 = scmp.lt.s32.totalorder %s25, 0
        %s1257 = scalar_select %p1256, %s25, 0
        %s1258 = sadd.s32 %s1257, %s1255
        %s1259 = scalar_lea.vmem %s6, %s1258
      $region60: #{bottleneckx_forward.4} parent=51 // pred_fallthru
        _
    $region52: #{bottleneckx_forward.4} parent=5 // pred_fallthru
      _
  $region6: #{bottleneckx_forward.4} parent=0 // loop_footer
    %s17 = sadd.s32 1, %s13
  $region7: #{bottleneckx_forward.4} parent=0 // loop_footer_branch
    %12 = sbr.rel target = $region3
  $region8: #{bottleneckx_forward.4} parent=0 // loop_exit
    _

</llo_original>
